<compile_context>
chip_gen: v7x
topology: tpu7x:2x2x1
jax: 0.10.0
libtpu: 0.0.40
codegen_flags: <defaults>
</compile_context>

<pallas_src>
import math
import jax
import jax.numpy as jnp
from jax.experimental import pallas as pl
from jax.experimental.pallas import tpu as pltpu

# ---- problem sizes (consistent with the module) ----
B = 2          # batch
S = 8          # sequence / node rows fed to attention
LOW = 16       # input_size (low-res graph size)
HIGH = 32      # hidden_size (high-res graph size)
NHEADS = 2     # attention heads per DisAttention
NPAIR = 3 * NHEADS   # (gate, head) pairs; pair index p = gate * NHEADS + head

_BIG = 9e15
_SCALE = 1.0 / math.sqrt(HIGH)


def gru_cell_kernel(data_ref, w32_ref, wkm_ref, w96_ref, bias_ref, hy_ref):
    f32, bf16 = jnp.float32, jnp.bfloat16

    # ---- unpack slabs (all slice offsets are sublane-tile aligned) ----
    X_pad = data_ref[0:16, :]        # (16,32) f32, cols 16:32 zero
    G_pad = data_ref[16:48, :]       # (32,32) f32, rows 16:32 zero (G_b in cols b*16)
    H = data_ref[48:64, :]           # (16,32) f32

    wqT = w32_ref[0:96, :]           # (96,32) bf16, wq_p^T rows p*16, cols 16:32 zero
    whh_n = w32_ref[96:128, :]       # (32,32) bf16

    wk = wkm_ref[0:16, :]            # (16,192) bf16, wk_p in cols p*32, scale folded in
    maskv = wkm_ref[16:112, :]       # (96,192) bf16: 0 off-block, 1/2 in diag blocks

    wv = w96_ref[0:32, :]            # (32,96) bf16, wv_p in cols p*16, rows 16:32 zero
    wout = w96_ref[32:224, :]        # (192,96) bf16, block (p, p//2) = wout block
    whh_rz = w96_ref[224:256, :]     # (32,96) bf16, cols 64:96 zero

    bias = bias_ref[...]             # (1,96) f32: [bout_r+bhh_r | bout_z+bhh_z | bout_n+bhh_n]

    # ---- all V projections (6 pairs, both batches): one dot ----
    V_all = jnp.dot(X_pad.astype(bf16), wv, preferred_element_type=f32)   # (16,96)
    # ---- A = wq^T (x^T x) for all pairs, both batches: one dot ----
    A_cat = jnp.dot(wqT, G_pad.astype(bf16), preferred_element_type=f32)  # (96,32)

    heads = []
    for b in range(B):                                   # B == 2, fully unrolled
        A_b = A_cat[:, b * LOW:(b + 1) * LOW].astype(bf16)                # (96,16)
        # all 6 attention-logit blocks at once (diag blocks of E are e_p)
        E = jnp.dot(A_b, wk, preferred_element_type=f32)                  # (96,192) f32

        link = maskv > 1.5          # linkage > 0, inside diagonal blocks only
        pos_e = jnp.where(link, E, _BIG)
        neg_e = jnp.where(link, E, -_BIG)
        mn = jnp.min(pos_e, axis=-1, keepdims=True)
        mx = jnp.max(neg_e, axis=-1, keepdims=True)
        den = mx - mn
        den = jnp.where(den == 0.0, 1e-6, den)
        En = jnp.where(link, (E - mn) / den, -_BIG)                       # min_max_norm

        # softmax over each row, restricted to the row's diagonal block
        m = jnp.max(En, axis=-1, keepdims=True)
        p = jnp.exp(En - m)
        p = jnp.where(maskv > 0.5, p, 0.0)         # zero outside diag blocks
        att = p * pl.reciprocal(jnp.sum(p, axis=-1, keepdims=True), approx=True)

        V_b = V_all[b * S:(b + 1) * S, :].astype(bf16)                    # (8,96)
        heads.append(jnp.dot(V_b, att.astype(bf16),
                             preferred_element_type=f32))                 # (8,192)

    HEAD = jnp.concatenate(heads, axis=0).astype(bf16)                    # (16,192)
    GATE_X = jnp.dot(HEAD, wout, preferred_element_type=f32)              # (16,96)
    HZ = jnp.dot(H.astype(bf16), whh_rz, preferred_element_type=f32)      # (16,96), cols 64:96 = 0
    SUMX = GATE_X + HZ + bias                                             # (16,96)

    rz = jax.nn.sigmoid(SUMX[:, 0:2 * HIGH])                              # (16,64)
    r = rz[:, 0:HIGH]
    z = rz[:, HIGH:2 * HIGH]
    hn = jnp.dot((H * r).astype(bf16), whh_n, preferred_element_type=f32)  # (16,32)
    n = jnp.tanh(SUMX[:, 2 * HIGH:] + hn)
    hy_ref[...] = z * H + (1.0 - z) * n


def init_params(key):
    """PyTorch-shaped params: every weight ~ U(-std, std), std = 1/sqrt(hidden)."""
    std = 1.0 / math.sqrt(HIGH)
    shapes = {
        "wq":   (3, NHEADS, LOW, LOW),
        "wk":   (3, NHEADS, LOW, HIGH),
        "wv":   (3, NHEADS, LOW, LOW),
        "wout": (3, HIGH * NHEADS, HIGH),   # nn.Linear weight, stored transposed
        "bout": (3, 1, HIGH),
        "whh":  (3, HIGH, HIGH),            # nn.Linear weight, stored transposed
        "bhh":  (3, 1, HIGH),
    }
    params = {}
    for name, shape in shapes.items():
        key, sub = jax.random.split(key)
        params[name] = jax.random.uniform(sub, shape, jnp.float32, -std, std)
    return params, key


def prepare_params(params, linkage):
    """One-time wrapper-side layout: block-concatenate weights into DMA slabs."""
    bf16 = jnp.bfloat16
    wq, wk, wv = params["wq"], params["wk"], params["wv"]
    wout, bout = params["wout"], params["bout"]
    whh, bhh = params["whh"], params["bhh"]

    # --- w32 slab (128,32) bf16: [wq^T padded ; whh_n] ---
    wqT = jnp.swapaxes(wq, -1, -2).reshape(NPAIR * LOW, LOW)              # (96,16)
    wqT_pad = jnp.pad(wqT, ((0, 0), (0, HIGH - LOW)))                     # (96,32)
    w32 = jnp.concatenate([wqT_pad, whh[2]], axis=0).astype(bf16)         # (128,32)

    # --- wk+mask slab (112,192) bf16: [Wk_cat * scale ; block-diag mask] ---
    wk_cat = jnp.transpose(wk, (2, 0, 1, 3)).reshape(LOW, NPAIR * HIGH) * _SCALE  # (16,192)
    linkb = 1.0 + (linkage > 0).astype(jnp.float32)                       # (16,32): 1 or 2
    mask = jnp.kron(jnp.eye(NPAIR, dtype=jnp.float32), linkb)             # (96,192)
    wkm = jnp.concatenate([wk_cat, mask], axis=0).astype(bf16)            # (112,192)

    # --- w96 slab (256,96) bf16: [Wv padded ; block Wout ; whh_rz padded] ---
    wv_cat = jnp.transpose(wv, (2, 0, 1, 3)).reshape(LOW, NPAIR * LOW)    # (16,96)
    wv_pad = jnp.pad(wv_cat, ((0, HIGH - LOW), (0, 0)))                   # (32,96)
    wout_blk = jnp.zeros((NPAIR * HIGH, 3 * HIGH), jnp.float32)           # (192,96)
    for g in range(3):
        for n in range(NHEADS):
            p = g * NHEADS + n
            wout_blk = wout_blk.at[p * HIGH:(p + 1) * HIGH,
                                   g * HIGH:(g + 1) * HIGH].set(
                wout[g, n * HIGH:(n + 1) * HIGH, :])
    whh_rz = jnp.concatenate([whh[0], whh[1]], axis=-1)                   # (32,64)
    whh_rz_pad = jnp.pad(whh_rz, ((0, 0), (0, 3 * HIGH - 2 * HIGH)))      # (32,96)
    w96 = jnp.concatenate([wv_pad, wout_blk, whh_rz_pad], axis=0).astype(bf16)  # (256,96)

    # --- bias (1,96) f32: bout and bhh pre-summed per gate ---
    bias = jnp.concatenate([bout[0] + bhh[0], bout[1] + bhh[1], bout[2] + bhh[2]],
                           axis=-1)                                        # (1,96)

    return {"w32": w32, "wkm": wkm, "w96": w96, "bias": bias}


@jax.jit
def gru_cell_forward(x, h, kp):
    """x: (B,S,LOW), h: (B,S,HIGH). Returns hy: (B,S,HIGH)."""
    X = x.reshape(B * S, LOW)
    H = h.reshape(B * S, HIGH)
    # Gram matrices G_b = x_b^T x_b in f32 (tiny XLA op, avoids in-kernel transposes)
    G = jnp.einsum("bsl,bsm->lbm", x, x).reshape(LOW, B * LOW)            # (16,32)
    data = jnp.concatenate([
        jnp.pad(X, ((0, 0), (0, HIGH - LOW))),                            # (16,32)
        jnp.pad(G, ((0, HIGH - LOW), (0, 0))),                            # (32,32)
        H,                                                                # (16,32)
    ], axis=0)                                                            # (64,32)

    vmem = pl.BlockSpec(memory_space=pltpu.MemorySpace.VMEM)
    hy = pl.pallas_call(
        gru_cell_kernel,
        out_shape=jax.ShapeDtypeStruct((B * S, HIGH), jnp.float32),
        in_specs=[vmem] * 5,
        out_specs=vmem,
    )(data, kp["w32"], kp["wkm"], kp["w96"], kp["bias"])
    return hy.reshape(B, S, HIGH)


def gru_cell_reference(x, h, linkage, params):
    """Pure-JAX f32 reference mirroring the PyTorch module."""
    def dis_attention(xv, g):
        heads = []
        for n in range(NHEADS):
            Q = xv @ params["wq"][g, n]
            K = xv @ params["wk"][g, n]
            V = xv @ params["wv"][g, n]
            e = jnp.einsum("bsl,bsh->blh", Q, K) / math.sqrt(HIGH)
            mask = (linkage[None] > 0)
            pos_e = jnp.where(mask, e, _BIG)
            neg_e = jnp.where(mask, e, -_BIG)
            mn = pos_e.min(-1, keepdims=True)
            mx = neg_e.max(-1, keepdims=True)
            den = jnp.where(mx - mn == 0.0, 1e-6, mx - mn)
            e = jnp.where(mask, (e - mn) / den, -_BIG)
            att = jax.nn.softmax(e, axis=-1)
            heads.append(jnp.einsum("bsl,blh->bsh", V, att))
        cat = jnp.concatenate(heads, axis=-1)
        return cat @ params["wout"][g] + params["bout"][g]

    x2r = dis_attention(x, 0)
    x2z = dis_attention(x, 1)
    x2n = dis_attention(x, 2)
    h2r = h @ params["whh"][0] + params["bhh"][0]
    h2z = h @ params["whh"][1] + params["bhh"][1]
    r = jax.nn.sigmoid(x2r + h2r)
    z = jax.nn.sigmoid(x2z + h2z)
    h2n = (h * r) @ params["whh"][2] + params["bhh"][2]
    n = jnp.tanh(x2n + h2n)
    return z * h + (1.0 - z) * n


if __name__ == "__main__":
    key = jax.random.PRNGKey(0)
    params, key = init_params(key)

    key, kx, kh, kl = jax.random.split(key, 4)
    x = jax.random.normal(kx, (B, S, LOW), jnp.float32)
    h = jax.random.normal(kh, (B, S, HIGH), jnp.float32)
    # linkage mask (LOW, HIGH): ~60% connected, values in {0, 1}
    linkage = (jax.random.uniform(kl, (LOW, HIGH)) < 0.6).astype(jnp.float32)

    kp = prepare_params(params, linkage)   # one-time layout work, outside the kernel

    hy = gru_cell_forward(x, h, kp)
    jax.block_until_ready(hy)
    assert hy.shape == (B, S, HIGH) and hy.dtype == jnp.float32
    assert bool(jnp.all(jnp.isfinite(hy)))

    # loose correctness check vs. f32 reference (kernel uses bf16 MXU operands
    # and an approximate softmax reciprocal)
    hy_ref = gru_cell_reference(x, h, linkage, params)
    err = float(jnp.max(jnp.abs(hy - hy_ref)))
    assert err < 1e-1, f"max abs error vs reference: {err}"
    print("KERNEL_OK")
</pallas_src>

<mosaic_0001>
module attributes {stable_mosaic.version = 11 : i64} {
  func.func @gru_cell_kernel(%arg0: memref<64x32xf32, #tpu.memory_space<vmem>>, %arg1: memref<128x32xbf16, #tpu.memory_space<vmem>>, %arg2: memref<112x192xbf16, #tpu.memory_space<vmem>>, %arg3: memref<256x96xbf16, #tpu.memory_space<vmem>>, %arg4: memref<1x96xf32, #tpu.memory_space<vmem>>, %arg5: memref<16x32xf32, #tpu.memory_space<vmem>>) attributes {dimension_semantics = [], scalar_prefetch = 0 : i64, scratch_operands = 0 : i64, tpu.core_type = #tpu.core_type<tc>} {
    %c0 = arith.constant 0 : index
    %c0_0 = arith.constant 0 : index
    %0 = vector.load %arg0[%c0, %c0_0] : memref<64x32xf32, #tpu.memory_space<vmem>>, vector<16x32xf32>
    %c16 = arith.constant 16 : index
    %c0_1 = arith.constant 0 : index
    %1 = vector.load %arg0[%c16, %c0_1] : memref<64x32xf32, #tpu.memory_space<vmem>>, vector<32x32xf32>
    %c48 = arith.constant 48 : index
    %c0_2 = arith.constant 0 : index
    %2 = vector.load %arg0[%c48, %c0_2] : memref<64x32xf32, #tpu.memory_space<vmem>>, vector<16x32xf32>
    %c0_3 = arith.constant 0 : index
    %c0_4 = arith.constant 0 : index
    %3 = vector.load %arg1[%c0_3, %c0_4] : memref<128x32xbf16, #tpu.memory_space<vmem>>, vector<96x32xbf16>
    %c96 = arith.constant 96 : index
    %c0_5 = arith.constant 0 : index
    %4 = vector.load %arg1[%c96, %c0_5] : memref<128x32xbf16, #tpu.memory_space<vmem>>, vector<32x32xbf16>
    %c0_6 = arith.constant 0 : index
    %c0_7 = arith.constant 0 : index
    %5 = vector.load %arg2[%c0_6, %c0_7] : memref<112x192xbf16, #tpu.memory_space<vmem>>, vector<16x192xbf16>
    %c16_8 = arith.constant 16 : index
    %c0_9 = arith.constant 0 : index
    %6 = vector.load %arg2[%c16_8, %c0_9] : memref<112x192xbf16, #tpu.memory_space<vmem>>, vector<96x192xbf16>
    %c0_10 = arith.constant 0 : index
    %c0_11 = arith.constant 0 : index
    %7 = vector.load %arg3[%c0_10, %c0_11] : memref<256x96xbf16, #tpu.memory_space<vmem>>, vector<32x96xbf16>
    %c32 = arith.constant 32 : index
    %c0_12 = arith.constant 0 : index
    %8 = vector.load %arg3[%c32, %c0_12] : memref<256x96xbf16, #tpu.memory_space<vmem>>, vector<192x96xbf16>
    %c224 = arith.constant 224 : index
    %c0_13 = arith.constant 0 : index
    %9 = vector.load %arg3[%c224, %c0_13] : memref<256x96xbf16, #tpu.memory_space<vmem>>, vector<32x96xbf16>
    %c0_14 = arith.constant 0 : index
    %c0_15 = arith.constant 0 : index
    %10 = vector.load %arg4[%c0_14, %c0_15] : memref<1x96xf32, #tpu.memory_space<vmem>>, vector<1x96xf32>
    %11 = arith.truncf %0 : vector<16x32xf32> to vector<16x32xbf16>
    %cst = arith.constant dense<0.000000e+00> : vector<16x96xf32>
    %12 = tpu.matmul %11, %7, %cst {dimension_numbers = #tpu.dot_dimension_numbers<[1], [0], [0], [1], [0, 0, 1, 1], [], []>} : vector<16x32xbf16>, vector<32x96xbf16>, vector<16x96xf32> -> vector<16x96xf32>
    %13 = arith.truncf %1 : vector<32x32xf32> to vector<32x32xbf16>
    %cst_16 = arith.constant dense<0.000000e+00> : vector<96x32xf32>
    %14 = tpu.matmul %3, %13, %cst_16 {dimension_numbers = #tpu.dot_dimension_numbers<[1], [0], [0], [1], [0, 0, 1, 1], [], []>} : vector<96x32xbf16>, vector<32x32xbf16>, vector<96x32xf32> -> vector<96x32xf32>
    %15 = vector.extract_strided_slice %14 {offsets = [0, 0], sizes = [96, 16], strides = [1, 1]} : vector<96x32xf32> to vector<96x16xf32>
    %16 = arith.truncf %15 : vector<96x16xf32> to vector<96x16xbf16>
    %cst_17 = arith.constant dense<0.000000e+00> : vector<96x192xf32>
    %17 = tpu.matmul %16, %5, %cst_17 {dimension_numbers = #tpu.dot_dimension_numbers<[1], [0], [0], [1], [0, 0, 1, 1], [], []>} : vector<96x16xbf16>, vector<16x192xbf16>, vector<96x192xf32> -> vector<96x192xf32>
    %cst_18 = arith.constant 1.500000e+00 : bf16
    %18 = vector.broadcast %cst_18 : bf16 to vector<96x192xbf16>
    %19 = arith.cmpf ogt, %6, %18 : vector<96x192xbf16>
    %cst_19 = arith.constant 9.000000e+15 : f32
    %20 = vector.broadcast %cst_19 : f32 to vector<96x192xf32>
    %21 = arith.select %19, %17, %20 : vector<96x192xi1>, vector<96x192xf32>
    %cst_20 = arith.constant -9.000000e+15 : f32
    %22 = vector.broadcast %cst_20 : f32 to vector<96x192xf32>
    %23 = arith.select %19, %17, %22 : vector<96x192xi1>, vector<96x192xf32>
    %cst_21 = arith.constant dense<0x7F800000> : vector<96xf32>
    %24 = vector.multi_reduction <minimumf>, %21, %cst_21 [1] : vector<96x192xf32> to vector<96xf32>
    %25 = vector.shape_cast %24 : vector<96xf32> to vector<96x1xf32>
    %cst_22 = arith.constant dense<0xFF800000> : vector<96xf32>
    %26 = vector.multi_reduction <maximumf>, %23, %cst_22 [1] : vector<96x192xf32> to vector<96xf32>
    %27 = vector.shape_cast %26 : vector<96xf32> to vector<96x1xf32>
    %28 = arith.subf %27, %25 : vector<96x1xf32>
    %cst_23 = arith.constant 0.000000e+00 : f32
    %29 = vector.broadcast %cst_23 : f32 to vector<96x1xf32>
    %30 = arith.cmpf oeq, %28, %29 : vector<96x1xf32>
    %cst_24 = arith.constant 9.99999997E-7 : f32
    %31 = vector.broadcast %cst_24 : f32 to vector<96x1xf32>
    %32 = arith.select %30, %31, %28 : vector<96x1xi1>, vector<96x1xf32>
    %33 = vector.broadcast %25 : vector<96x1xf32> to vector<96x192xf32>
    %34 = arith.subf %17, %33 : vector<96x192xf32>
    %35 = vector.broadcast %32 : vector<96x1xf32> to vector<96x192xf32>
    %36 = arith.divf %34, %35 : vector<96x192xf32>
    %cst_25 = arith.constant -9.000000e+15 : f32
    %37 = vector.broadcast %cst_25 : f32 to vector<96x192xf32>
    %38 = arith.select %19, %36, %37 : vector<96x192xi1>, vector<96x192xf32>
    %cst_26 = arith.constant dense<0xFF800000> : vector<96xf32>
    %39 = vector.multi_reduction <maximumf>, %38, %cst_26 [1] : vector<96x192xf32> to vector<96xf32>
    %40 = vector.shape_cast %39 : vector<96xf32> to vector<96x1xf32>
    %41 = vector.broadcast %40 : vector<96x1xf32> to vector<96x192xf32>
    %42 = arith.subf %38, %41 : vector<96x192xf32>
    %43 = math.exp %42 : vector<96x192xf32>
    %cst_27 = arith.constant 5.000000e-01 : bf16
    %44 = vector.broadcast %cst_27 : bf16 to vector<96x192xbf16>
    %45 = arith.cmpf ogt, %6, %44 : vector<96x192xbf16>
    %cst_28 = arith.constant 0.000000e+00 : f32
    %46 = vector.broadcast %cst_28 : f32 to vector<96x192xf32>
    %47 = arith.select %45, %43, %46 : vector<96x192xi1>, vector<96x192xf32>
    %cst_29 = arith.constant dense<0.000000e+00> : vector<96xf32>
    %48 = vector.multi_reduction <add>, %47, %cst_29 [1] : vector<96x192xf32> to vector<96xf32>
    %49 = vector.shape_cast %48 : vector<96xf32> to vector<96x1xf32>
    %50 = tpu.reciprocal %49 {approx = true} : vector<96x1xf32> -> vector<96x1xf32>
    %51 = vector.broadcast %50 : vector<96x1xf32> to vector<96x192xf32>
    %52 = arith.mulf %47, %51 : vector<96x192xf32>
    %53 = vector.extract_strided_slice %12 {offsets = [0, 0], sizes = [8, 96], strides = [1, 1]} : vector<16x96xf32> to vector<8x96xf32>
    %54 = arith.truncf %53 : vector<8x96xf32> to vector<8x96xbf16>
    %55 = arith.truncf %52 : vector<96x192xf32> to vector<96x192xbf16>
    %cst_30 = arith.constant dense<0.000000e+00> : vector<8x192xf32>
    %56 = tpu.matmul %54, %55, %cst_30 {dimension_numbers = #tpu.dot_dimension_numbers<[1], [0], [0], [1], [0, 0, 1, 1], [], []>} : vector<8x96xbf16>, vector<96x192xbf16>, vector<8x192xf32> -> vector<8x192xf32>
    %57 = vector.extract_strided_slice %14 {offsets = [0, 16], sizes = [96, 16], strides = [1, 1]} : vector<96x32xf32> to vector<96x16xf32>
    %58 = arith.truncf %57 : vector<96x16xf32> to vector<96x16xbf16>
    %cst_31 = arith.constant dense<0.000000e+00> : vector<96x192xf32>
    %59 = tpu.matmul %58, %5, %cst_31 {dimension_numbers = #tpu.dot_dimension_numbers<[1], [0], [0], [1], [0, 0, 1, 1], [], []>} : vector<96x16xbf16>, vector<16x192xbf16>, vector<96x192xf32> -> vector<96x192xf32>
    %cst_32 = arith.constant 1.500000e+00 : bf16
    %60 = vector.broadcast %cst_32 : bf16 to vector<96x192xbf16>
    %61 = arith.cmpf ogt, %6, %60 : vector<96x192xbf16>
    %cst_33 = arith.constant 9.000000e+15 : f32
    %62 = vector.broadcast %cst_33 : f32 to vector<96x192xf32>
    %63 = arith.select %61, %59, %62 : vector<96x192xi1>, vector<96x192xf32>
    %cst_34 = arith.constant -9.000000e+15 : f32
    %64 = vector.broadcast %cst_34 : f32 to vector<96x192xf32>
    %65 = arith.select %61, %59, %64 : vector<96x192xi1>, vector<96x192xf32>
    %cst_35 = arith.constant dense<0x7F800000> : vector<96xf32>
    %66 = vector.multi_reduction <minimumf>, %63, %cst_35 [1] : vector<96x192xf32> to vector<96xf32>
    %67 = vector.shape_cast %66 : vector<96xf32> to vector<96x1xf32>
    %cst_36 = arith.constant dense<0xFF800000> : vector<96xf32>
    %68 = vector.multi_reduction <maximumf>, %65, %cst_36 [1] : vector<96x192xf32> to vector<96xf32>
    %69 = vector.shape_cast %68 : vector<96xf32> to vector<96x1xf32>
    %70 = arith.subf %69, %67 : vector<96x1xf32>
    %cst_37 = arith.constant 0.000000e+00 : f32
    %71 = vector.broadcast %cst_37 : f32 to vector<96x1xf32>
    %72 = arith.cmpf oeq, %70, %71 : vector<96x1xf32>
    %cst_38 = arith.constant 9.99999997E-7 : f32
    %73 = vector.broadcast %cst_38 : f32 to vector<96x1xf32>
    %74 = arith.select %72, %73, %70 : vector<96x1xi1>, vector<96x1xf32>
    %75 = vector.broadcast %67 : vector<96x1xf32> to vector<96x192xf32>
    %76 = arith.subf %59, %75 : vector<96x192xf32>
    %77 = vector.broadcast %74 : vector<96x1xf32> to vector<96x192xf32>
    %78 = arith.divf %76, %77 : vector<96x192xf32>
    %cst_39 = arith.constant -9.000000e+15 : f32
    %79 = vector.broadcast %cst_39 : f32 to vector<96x192xf32>
    %80 = arith.select %61, %78, %79 : vector<96x192xi1>, vector<96x192xf32>
    %cst_40 = arith.constant dense<0xFF800000> : vector<96xf32>
    %81 = vector.multi_reduction <maximumf>, %80, %cst_40 [1] : vector<96x192xf32> to vector<96xf32>
    %82 = vector.shape_cast %81 : vector<96xf32> to vector<96x1xf32>
    %83 = vector.broadcast %82 : vector<96x1xf32> to vector<96x192xf32>
    %84 = arith.subf %80, %83 : vector<96x192xf32>
    %85 = math.exp %84 : vector<96x192xf32>
    %cst_41 = arith.constant 5.000000e-01 : bf16
    %86 = vector.broadcast %cst_41 : bf16 to vector<96x192xbf16>
    %87 = arith.cmpf ogt, %6, %86 : vector<96x192xbf16>
    %cst_42 = arith.constant 0.000000e+00 : f32
    %88 = vector.broadcast %cst_42 : f32 to vector<96x192xf32>
    %89 = arith.select %87, %85, %88 : vector<96x192xi1>, vector<96x192xf32>
    %cst_43 = arith.constant dense<0.000000e+00> : vector<96xf32>
    %90 = vector.multi_reduction <add>, %89, %cst_43 [1] : vector<96x192xf32> to vector<96xf32>
    %91 = vector.shape_cast %90 : vector<96xf32> to vector<96x1xf32>
    %92 = tpu.reciprocal %91 {approx = true} : vector<96x1xf32> -> vector<96x1xf32>
    %93 = vector.broadcast %92 : vector<96x1xf32> to vector<96x192xf32>
    %94 = arith.mulf %89, %93 : vector<96x192xf32>
    %95 = vector.extract_strided_slice %12 {offsets = [8, 0], sizes = [8, 96], strides = [1, 1]} : vector<16x96xf32> to vector<8x96xf32>
    %96 = arith.truncf %95 : vector<8x96xf32> to vector<8x96xbf16>
    %97 = arith.truncf %94 : vector<96x192xf32> to vector<96x192xbf16>
    %cst_44 = arith.constant dense<0.000000e+00> : vector<8x192xf32>
    %98 = tpu.matmul %96, %97, %cst_44 {dimension_numbers = #tpu.dot_dimension_numbers<[1], [0], [0], [1], [0, 0, 1, 1], [], []>} : vector<8x96xbf16>, vector<96x192xbf16>, vector<8x192xf32> -> vector<8x192xf32>
    %99 = tpu.concatenate %56, %98 in 0 : vector<8x192xf32>, vector<8x192xf32> -> vector<16x192xf32>
    %100 = arith.truncf %99 : vector<16x192xf32> to vector<16x192xbf16>
    %cst_45 = arith.constant dense<0.000000e+00> : vector<16x96xf32>
    %101 = tpu.matmul %100, %8, %cst_45 {dimension_numbers = #tpu.dot_dimension_numbers<[1], [0], [0], [1], [0, 0, 1, 1], [], []>} : vector<16x192xbf16>, vector<192x96xbf16>, vector<16x96xf32> -> vector<16x96xf32>
    %102 = arith.truncf %2 : vector<16x32xf32> to vector<16x32xbf16>
    %cst_46 = arith.constant dense<0.000000e+00> : vector<16x96xf32>
    %103 = tpu.matmul %102, %9, %cst_46 {dimension_numbers = #tpu.dot_dimension_numbers<[1], [0], [0], [1], [0, 0, 1, 1], [], []>} : vector<16x32xbf16>, vector<32x96xbf16>, vector<16x96xf32> -> vector<16x96xf32>
    %104 = arith.addf %101, %103 : vector<16x96xf32>
    %105 = vector.broadcast %10 : vector<1x96xf32> to vector<16x96xf32>
    %106 = arith.addf %104, %105 : vector<16x96xf32>
    %107 = vector.extract_strided_slice %106 {offsets = [0, 0], sizes = [16, 64], strides = [1, 1]} : vector<16x96xf32> to vector<16x64xf32>
    %108 = arith.negf %107 : vector<16x64xf32>
    %109 = math.exp %108 : vector<16x64xf32>
    %cst_47 = arith.constant 1.000000e+00 : f32
    %110 = vector.broadcast %cst_47 : f32 to vector<16x64xf32>
    %111 = arith.addf %110, %109 : vector<16x64xf32>
    %112 = arith.divf %110, %111 : vector<16x64xf32>
    %113 = vector.extract_strided_slice %112 {offsets = [0, 0], sizes = [16, 32], strides = [1, 1]} : vector<16x64xf32> to vector<16x32xf32>
    %114 = vector.extract_strided_slice %112 {offsets = [0, 32], sizes = [16, 32], strides = [1, 1]} : vector<16x64xf32> to vector<16x32xf32>
    %115 = arith.mulf %2, %113 : vector<16x32xf32>
    %116 = arith.truncf %115 : vector<16x32xf32> to vector<16x32xbf16>
    %cst_48 = arith.constant dense<0.000000e+00> : vector<16x32xf32>
    %117 = tpu.matmul %116, %4, %cst_48 {dimension_numbers = #tpu.dot_dimension_numbers<[1], [0], [0], [1], [0, 0, 1, 1], [], []>} : vector<16x32xbf16>, vector<32x32xbf16>, vector<16x32xf32> -> vector<16x32xf32>
    %118 = vector.extract_strided_slice %106 {offsets = [0, 64], sizes = [16, 32], strides = [1, 1]} : vector<16x96xf32> to vector<16x32xf32>
    %119 = arith.addf %118, %117 : vector<16x32xf32>
    %120 = math.tanh %119 : vector<16x32xf32>
    %121 = arith.mulf %114, %2 : vector<16x32xf32>
    %cst_49 = arith.constant 1.000000e+00 : f32
    %122 = vector.broadcast %cst_49 : f32 to vector<16x32xf32>
    %123 = arith.subf %122, %114 : vector<16x32xf32>
    %124 = arith.mulf %123, %120 : vector<16x32xf32>
    %125 = arith.addf %121, %124 : vector<16x32xf32>
    %c0_50 = arith.constant 0 : index
    %c0_51 = arith.constant 0 : index
    %126 = vector.load %arg5[%c0_50, %c0_51] : memref<16x32xf32, #tpu.memory_space<vmem>>, vector<16x32xf32>
    tpu.vector_store %arg5[%c0_50, %c0_51], %125 {strides = array<i32>} : memref<16x32xf32, #tpu.memory_space<vmem>>, vector<16x32xf32>,
    return
  }
}

</mosaic_0001>

<llo_original>
// kernel: gru_cell_forward.1
$region0: #{gru_cell_forward.1}
  #allocation0 [shape = 'u32[]', space=smem, size = 0x4, offset = 0x4, fixed_abs, tag = 'smem constant byte address 0x4 - core index']
  #allocation1 [shape = 'u32[144,128]{1,0:T(1,128)}', space=vmem, size = 0x12000, scoped, tag = 'internal scratch']
  %s0 = inlined_call_operand.vmem [shape: f32[64,32], index: 0, kind: input, shape index: {}]
  %s1 = inlined_call_operand.vmem [shape: bf16[128,32], index: 1, kind: input, shape index: {}]
  %s2 = inlined_call_operand.vmem [shape: bf16[112,192], index: 2, kind: input, shape index: {}]
  %s3 = inlined_call_operand.vmem [shape: bf16[256,96], index: 3, kind: input, shape index: {}]
  %s4 = inlined_call_operand.vmem [shape: f32[1,96], index: 4, kind: input, shape index: {}]
  %s5 = inlined_call_operand.hbm [shape: f32[16,32], index: 5, kind: output, shape index: {}]
  %s6 = sld [smem:[#allocation0]]
  $region30: #{gru_cell_forward.1} parent=0
    _
  %s8 = ssub.s32 1, %s6
  %s9 = scalar_select 0, %s8, %s6
  $region1: #{gru_cell_forward.1} parent=0
    #allocation2 [shape = 'u8[8192]{0}', space=vmem, size = 0x2000, scoped, tag = 'output window, operand 0, single buffered']
    #allocation3 [shape = 's32[1]{0}', space=sflag, size = 0x4, scoped, tag = 'scoped memory for gru_cell_forward.1']
    %10 = vsyncpa [#allocation3], 0
    // Predicated region
    $region2: #{gru_cell_forward.1} parent=1 // pred_check
      _
    $region3: #{gru_cell_forward.1} parent=1 // pred_check_branch
      %12 = sbr.rel (0) target = $region5
    $region4: #{gru_cell_forward.1} parent=1 // pred_region
      _
    $region5: #{gru_cell_forward.1} parent=1 // pred_fallthru
      _
    // Predicated region
    $region6: #{gru_cell_forward.1} parent=1 // pred_check
      _
    $region7: #{gru_cell_forward.1} parent=1 // pred_check_branch
      %14 = sbr.rel (0) target = $region9
    $region8: #{gru_cell_forward.1} parent=1 // pred_region
      _
    $region9: #{gru_cell_forward.1} parent=1 // pred_fallthru
      _
    // Predicated region
    $region10: #{gru_cell_forward.1} parent=1 // pred_check
      _
    $region11: #{gru_cell_forward.1} parent=1 // pred_check_branch
      %16 = sbr.rel (0) target = $region13
    $region12: #{gru_cell_forward.1} parent=1 // pred_region
      _
    $region13: #{gru_cell_forward.1} parent=1 // pred_fallthru
      _
    // Predicated region
    $region14: #{gru_cell_forward.1} parent=1 // pred_check
      _
    $region15: #{gru_cell_forward.1} parent=1 // pred_check_branch
      %18 = sbr.rel (0) target = $region17
    $region16: #{gru_cell_forward.1} parent=1 // pred_region
      _
    $region17: #{gru_cell_forward.1} parent=1 // pred_fallthru
      _
    // Predicated region
    $region18: #{gru_cell_forward.1} parent=1 // pred_check
      _
    $region19: #{gru_cell_forward.1} parent=1 // pred_check_branch
      %20 = sbr.rel (0) target = $region21
    $region20: #{gru_cell_forward.1} parent=1 // pred_region
      _
    $region21: #{gru_cell_forward.1} parent=1 // pred_fallthru
      _
    %v26 = vld [vmem:[%s0] sm:$0xff]
    %v27 = vld [vmem:[%s0 + $0x8] sm:$0xff]
    %v28 = vld [vmem:[%s0 + $0x10] sm:$0xff]
    %v29 = vld [vmem:[%s0 + $0x18] sm:$0xff]
    %v30 = vld [vmem:[%s0 + $0x20] sm:$0xff]
    %v31 = vld [vmem:[%s0 + $0x28] sm:$0xff]
    %v32 = vld [vmem:[%s0 + $0x30] sm:$0xff]
    %v33 = vld [vmem:[%s0 + $0x38] sm:$0xff]
    %v34 = vld [vmem:[%s1] sm:$0xf]
    %v35 = vld [vmem:[%s1 + $0x4] sm:$0xf]
    %v36 = vld [vmem:[%s1 + $0x8] sm:$0xf]
    %v37 = vld [vmem:[%s1 + $0xc] sm:$0xf]
    %v38 = vld [vmem:[%s1 + $0x10] sm:$0xf]
    %v39 = vld [vmem:[%s1 + $0x14] sm:$0xf]
    %v40 = vld [vmem:[%s1 + $0x18] sm:$0xf]
    %v41 = vld [vmem:[%s1 + $0x1c] sm:$0xf]
    %v42 = vld [vmem:[%s1 + $0x20] sm:$0xf]
    %v43 = vld [vmem:[%s1 + $0x24] sm:$0xf]
    %v44 = vld [vmem:[%s1 + $0x28] sm:$0xf]
    %v45 = vld [vmem:[%s1 + $0x2c] sm:$0xf]
    %v46 = vld [vmem:[%s1 + $0x30] sm:$0xf]
    %v47 = vld [vmem:[%s1 + $0x34] sm:$0xf]
    %v48 = vld [vmem:[%s1 + $0x38] sm:$0xf]
    %v49 = vld [vmem:[%s1 + $0x3c] sm:$0xf]
    %v50 = vld [vmem:[%s2] sm:$0xff]
    %v51 = vld [vmem:[%s2 + $0x8] sm:$0xff]
    %v52 = vld [vmem:[%s2 + $0x10] sm:$0xff]
    %v53 = vld [vmem:[%s2 + $0x18] sm:$0xff]
    %v54 = vld [vmem:[%s2 + $0x20] sm:$0xff]
    %v55 = vld [vmem:[%s2 + $0x28] sm:$0xff]
    %v56 = vld [vmem:[%s2 + $0x30] sm:$0xff]
    %v57 = vld [vmem:[%s2 + $0x38] sm:$0xff]
    %v58 = vld [vmem:[%s2 + $0x40] sm:$0xff]
    %v59 = vld [vmem:[%s2 + $0x48] sm:$0xff]
    %v60 = vld [vmem:[%s2 + $0x50] sm:$0xff]
    %v61 = vld [vmem:[%s2 + $0x58] sm:$0xff]
    %v62 = vld [vmem:[%s2 + $0x60] sm:$0xff]
    %v63 = vld [vmem:[%s2 + $0x68] sm:$0xff]
    %v64 = vld [vmem:[%s3] sm:$0xf]
    %v65 = vld [vmem:[%s3 + $0x4] sm:$0xf]
    %v66 = vld [vmem:[%s3 + $0x8] sm:$0xf]
    %v67 = vld [vmem:[%s3 + $0xc] sm:$0xf]
    %v68 = vld [vmem:[%s3 + $0x10] sm:$0xf]
    %v69 = vld [vmem:[%s3 + $0x14] sm:$0xf]
    %v70 = vld [vmem:[%s3 + $0x18] sm:$0xf]
    %v71 = vld [vmem:[%s3 + $0x1c] sm:$0xf]
    %v72 = vld [vmem:[%s3 + $0x20] sm:$0xf]
    %v73 = vld [vmem:[%s3 + $0x24] sm:$0xf]
    %v74 = vld [vmem:[%s3 + $0x28] sm:$0xf]
    %v75 = vld [vmem:[%s3 + $0x2c] sm:$0xf]
    %v76 = vld [vmem:[%s3 + $0x30] sm:$0xf]
    %v77 = vld [vmem:[%s3 + $0x34] sm:$0xf]
    %v78 = vld [vmem:[%s3 + $0x38] sm:$0xf]
    %v79 = vld [vmem:[%s3 + $0x3c] sm:$0xf]
    %v80 = vld [vmem:[%s3 + $0x40] sm:$0xf]
    %v81 = vld [vmem:[%s3 + $0x44] sm:$0xf]
    %v82 = vld [vmem:[%s3 + $0x48] sm:$0xf]
    %v83 = vld [vmem:[%s3 + $0x4c] sm:$0xf]
    %v84 = vld [vmem:[%s3 + $0x50] sm:$0xf]
    %v85 = vld [vmem:[%s3 + $0x54] sm:$0xf]
    %v86 = vld [vmem:[%s3 + $0x58] sm:$0xf]
    %v87 = vld [vmem:[%s3 + $0x5c] sm:$0xf]
    %v88 = vld [vmem:[%s3 + $0x60] sm:$0xf]
    %v89 = vld [vmem:[%s3 + $0x64] sm:$0xf]
    %v90 = vld [vmem:[%s3 + $0x68] sm:$0xf]
    %v91 = vld [vmem:[%s3 + $0x6c] sm:$0xf]
    %v92 = vld [vmem:[%s3 + $0x70] sm:$0xf]
    %v93 = vld [vmem:[%s3 + $0x74] sm:$0xf]
    %v94 = vld [vmem:[%s3 + $0x78] sm:$0xf]
    %v95 = vld [vmem:[%s3 + $0x7c] sm:$0xf]
    %v96 = vld [vmem:[%s4] sm:$0x1]
    %v97 = vpack.c.bf16 %v27, %v26
    %v102 = vunpack.c.l.b16 %v64
    %v103 = vunpack.c.l.b16 %v65
    %v104 = vunpack.c.l.b16 %v66
    %v105 = vunpack.c.l.b16 %v67
    %v106 = vpack.c.b16 %v103, %v102
    %v107 = vpack.c.b16 %v105, %v104
    %vm110 = vcmask 261120
    %v112 = vsel %vm110, %v97, 0
    %114 = vmatprep.subr.bf16.mxu0 0
    %115 = vmatpush1.bf16.msra.mxu0 %v106
    %116 = vmatprep.subr.bf16.mxu0 0
    %117 = vmatpush1.bf16.msra.mxu0 %v107
    %118 = vmatprep.subr.bf16.mxu0 0
    %119 = vmatpush1.bf16.msra.mxu0 0
    %120 = vmatprep.subr.bf16.mxu0 0
    %121 = vmatpush1.bf16.msra.mxu0 0
    %122 = vmatprep.subr.bf16.mxu0 0
    %123 = vmatpush1.bf16.msra.mxu0 0
    %124 = vmatprep.subr.bf16.mxu0 0
    %125 = vmatpush1.bf16.msra.mxu0 0
    %126 = vmatprep.subr.bf16.mxu0 0
    %127 = vmatpush1.bf16.msra.mxu0 0
    %128 = vmatprep.subr.bf16.mxu0 0
    %129 = vmatpush1.bf16.msra.mxu0 0
    %130 = vmatprep.subr.bf16.mxu0 0
    %131 = vmatpush1.bf16.msra.mxu0 0
    %132 = vmatprep.subr.bf16.mxu0 0
    %133 = vmatpush1.bf16.msra.mxu0 0
    %134 = vmatprep.subr.bf16.mxu0 0
    %135 = vmatpush1.bf16.msra.mxu0 0
    %136 = vmatprep.subr.bf16.mxu0 0
    %137 = vmatpush1.bf16.msra.mxu0 0
    %138 = vmatprep.subr.bf16.mxu0 0
    %139 = vmatpush1.bf16.msra.mxu0 0
    %140 = vmatprep.subr.bf16.mxu0 0
    %141 = vmatpush1.bf16.msra.mxu0 0
    %142 = vmatprep.subr.bf16.mxu0 0
    %143 = vmatpush1.bf16.msra.mxu0 0
    %144 = vmatprep.subr.bf16.mxu0 0
    %145 = vmatpush1.bf16.msra.mxu0 0
    %146 = vmatprep.mubr.bf16.mxu0 0
    %147 = vmatmul.mubr.bf16.gmra.mrb[0].mxu0 %v112
    %v148 = vpop.f32.mrb[0].mxu0
    %v149 = vadd.f32 0.0, %v148
    %v150 = vpop.f32.mrb[0].mxu0
    %v151 = vpop.f32.mrb[0].mxu0
    %v152 = vadd.f32 0.0, %v151
    %v153 = vpop.f32.mrb[0].mxu0
    %154 = vdwg.mxu0
    %v155 = vpack.c.bf16 %v29, %v28
    %v156 = vpack.c.bf16 %v31, %v30
    %v169 = vunpack.c.l.b16 %v34
    %v170 = vunpack.c.l.b16 %v35
    %v171 = vunpack.c.l.b16 %v36
    %v172 = vunpack.c.l.b16 %v37
    %v173 = vunpack.c.l.b16 %v38
    %v174 = vunpack.c.l.b16 %v39
    %v175 = vunpack.c.l.b16 %v40
    %v176 = vunpack.c.l.b16 %v41
    %v177 = vunpack.c.l.b16 %v42
    %v178 = vunpack.c.l.b16 %v43
    %v179 = vunpack.c.l.b16 %v44
    %v180 = vunpack.c.l.b16 %v45
    %v181 = vpack.c.b16 %v170, %v169
    %v182 = vpack.c.b16 %v172, %v171
    %v183 = vpack.c.b16 %v174, %v173
    %v184 = vpack.c.b16 %v176, %v175
    %v185 = vpack.c.b16 %v178, %v177
    %v186 = vpack.c.b16 %v180, %v179
    %v188 = vsel %vm110, %v181, 0
    %v191 = vsel %vm110, %v182, 0
    %v194 = vsel %vm110, %v183, 0
    %v197 = vsel %vm110, %v184, 0
    %v200 = vsel %vm110, %v185, 0
    %v203 = vsel %vm110, %v186, 0
    %205 = vmatprep.subr.bf16.mxu0 0
    %206 = vmatpush1.bf16.msra.mxu0 %v155
    %207 = vmatprep.subr.bf16.mxu0 0
    %208 = vmatpush1.bf16.msra.mxu0 %v156
    %209 = vmatprep.subr.bf16.mxu0 0
    %210 = vmatpush1.bf16.msra.mxu0 0
    %211 = vmatprep.subr.bf16.mxu0 0
    %212 = vmatpush1.bf16.msra.mxu0 0
    %213 = vmatprep.subr.bf16.mxu0 0
    %214 = vmatpush1.bf16.msra.mxu0 0
    %215 = vmatprep.subr.bf16.mxu0 0
    %216 = vmatpush1.bf16.msra.mxu0 0
    %217 = vmatprep.subr.bf16.mxu0 0
    %218 = vmatpush1.bf16.msra.mxu0 0
    %219 = vmatprep.subr.bf16.mxu0 0
    %220 = vmatpush1.bf16.msra.mxu0 0
    %221 = vmatprep.subr.bf16.mxu0 0
    %222 = vmatpush1.bf16.msra.mxu0 0
    %223 = vmatprep.subr.bf16.mxu0 0
    %224 = vmatpush1.bf16.msra.mxu0 0
    %225 = vmatprep.subr.bf16.mxu0 0
    %226 = vmatpush1.bf16.msra.mxu0 0
    %227 = vmatprep.subr.bf16.mxu0 0
    %228 = vmatpush1.bf16.msra.mxu0 0
    %229 = vmatprep.subr.bf16.mxu0 0
    %230 = vmatpush1.bf16.msra.mxu0 0
    %231 = vmatprep.subr.bf16.mxu0 0
    %232 = vmatpush1.bf16.msra.mxu0 0
    %233 = vmatprep.subr.bf16.mxu0 0
    %234 = vmatpush1.bf16.msra.mxu0 0
    %235 = vmatprep.subr.bf16.mxu0 0
    %236 = vmatpush1.bf16.msra.mxu0 0
    %237 = vmatprep.mubr.bf16.mxu0 0
    %238 = vmatmul.mubr.bf16.gmra.mrb[0].mxu0 %v188
    %v239 = vpop.f32.mrb[0].mxu0
    %v240 = vadd.f32 0.0, %v239
    %v241 = vpop.f32.mrb[0].mxu0
    %v242 = vpop.f32.mrb[0].mxu0
    %v243 = vadd.f32 0.0, %v242
    %v244 = vpop.f32.mrb[0].mxu0
    %245 = vmatprep.mubr.bf16.mxu0 0
    %246 = vmatmul.mubr.bf16.gmra.mrb[0].mxu0 %v191
    %v247 = vpop.f32.mrb[0].mxu0
    %v248 = vadd.f32 0.0, %v247
    %v249 = vpop.f32.mrb[0].mxu0
    %v250 = vpop.f32.mrb[0].mxu0
    %v251 = vadd.f32 0.0, %v250
    %v252 = vpop.f32.mrb[0].mxu0
    %253 = vmatprep.mubr.bf16.mxu0 0
    %254 = vmatmul.mubr.bf16.gmra.mrb[0].mxu0 %v194
    %v255 = vpop.f32.mrb[0].mxu0
    %v256 = vadd.f32 0.0, %v255
    %v257 = vpop.f32.mrb[0].mxu0
    %v258 = vpop.f32.mrb[0].mxu0
    %v259 = vadd.f32 0.0, %v258
    %v260 = vpop.f32.mrb[0].mxu0
    %261 = vmatprep.mubr.bf16.mxu0 0
    %262 = vmatmul.mubr.bf16.gmra.mrb[0].mxu0 %v197
    %v263 = vpop.f32.mrb[0].mxu0
    %v264 = vadd.f32 0.0, %v263
    %v265 = vpop.f32.mrb[0].mxu0
    %v266 = vpop.f32.mrb[0].mxu0
    %v267 = vadd.f32 0.0, %v266
    %v268 = vpop.f32.mrb[0].mxu0
    %269 = vmatprep.mubr.bf16.mxu0 0
    %270 = vmatmul.mubr.bf16.gmra.mrb[0].mxu0 %v200
    %v271 = vpop.f32.mrb[0].mxu0
    %v272 = vadd.f32 0.0, %v271
    %v273 = vpop.f32.mrb[0].mxu0
    %v274 = vpop.f32.mrb[0].mxu0
    %v275 = vadd.f32 0.0, %v274
    %v276 = vpop.f32.mrb[0].mxu0
    %277 = vmatprep.mubr.bf16.mxu0 0
    %278 = vmatmul.mubr.bf16.gmra.mrb[0].mxu0 %v203
    %v279 = vpop.f32.mrb[0].mxu0
    %v280 = vadd.f32 0.0, %v279
    %v281 = vpop.f32.mrb[0].mxu0
    %v282 = vpop.f32.mrb[0].mxu0
    %v283 = vadd.f32 0.0, %v282
    %v284 = vpop.f32.mrb[0].mxu0
    %285 = vdwg.mxu0
    %v286 = vpack.c.bf16 %v243, %v240
    %v287 = vpack.c.bf16 %v251, %v248
    %v288 = vpack.c.bf16 %v259, %v256
    %v289 = vpack.c.bf16 %v267, %v264
    %v290 = vpack.c.bf16 %v275, %v272
    %v291 = vpack.c.bf16 %v283, %v280
    %v294 = vunpack.c.l.b16 %v50
    %v295 = vunpack.c.h.b16 %v50
    %v296 = vunpack.c.l.b16 %v51
    %v297 = vunpack.c.h.b16 %v51
    %v298 = vpack.c.b16 %v296, %v294
    %v299 = vpack.c.b16 %v297, %v295
    %vm302 = vcmask 130048
    %v304 = vsel %vm302, %v286, 0
    %v307 = vsel %vm302, %v287, 0
    %v310 = vsel %vm302, %v288, 0
    %v313 = vsel %vm302, %v289, 0
    %v316 = vsel %vm302, %v290, 0
    %v319 = vsel %vm302, %v291, 0
    %321 = vmatprep.subr.bf16.mxu0 %v299
    %322 = vmatpush1.bf16.msra.mxu0 %v298
    %323 = vmatprep.subr.bf16.mxu0 0
    %324 = vmatpush1.bf16.msra.mxu0 0
    %325 = vmatprep.subr.bf16.mxu0 0
    %326 = vmatpush1.bf16.msra.mxu0 0
    %327 = vmatprep.subr.bf16.mxu0 0
    %328 = vmatpush1.bf16.msra.mxu0 0
    %329 = vmatprep.subr.bf16.mxu0 0
    %330 = vmatpush1.bf16.msra.mxu0 0
    %331 = vmatprep.subr.bf16.mxu0 0
    %332 = vmatpush1.bf16.msra.mxu0 0
    %333 = vmatprep.subr.bf16.mxu0 0
    %334 = vmatpush1.bf16.msra.mxu0 0
    %335 = vmatprep.subr.bf16.mxu0 0
    %336 = vmatpush1.bf16.msra.mxu0 0
    %337 = vmatprep.subr.bf16.mxu0 0
    %338 = vmatpush1.bf16.msra.mxu0 0
    %339 = vmatprep.subr.bf16.mxu0 0
    %340 = vmatpush1.bf16.msra.mxu0 0
    %341 = vmatprep.subr.bf16.mxu0 0
    %342 = vmatpush1.bf16.msra.mxu0 0
    %343 = vmatprep.subr.bf16.mxu0 0
    %344 = vmatpush1.bf16.msra.mxu0 0
    %345 = vmatprep.subr.bf16.mxu0 0
    %346 = vmatpush1.bf16.msra.mxu0 0
    %347 = vmatprep.subr.bf16.mxu0 0
    %348 = vmatpush1.bf16.msra.mxu0 0
    %349 = vmatprep.subr.bf16.mxu0 0
    %350 = vmatpush1.bf16.msra.mxu0 0
    %351 = vmatprep.subr.bf16.mxu0 0
    %352 = vmatpush1.bf16.msra.mxu0 0
    %353 = vmatprep.mubr.bf16.mxu0 0
    %354 = vmatmul.mubr.bf16.gmra.mrb[0].mxu0 %v304
    %v355 = vpop.f32.mrb[0].mxu0
    %v356 = vadd.f32 0.0, %v355
    %v357 = vpop.f32.mrb[0].mxu0
    %v358 = vadd.f32 0.0, %v357
    %v359 = vpop.f32.mrb[0].mxu0
    %v360 = vadd.f32 0.0, %v359
    %v361 = vpop.f32.mrb[0].mxu0
    %v362 = vadd.f32 0.0, %v361
    %363 = vmatprep.mubr.bf16.mxu0 0
    %364 = vmatmul.mubr.bf16.gmra.mrb[0].mxu0 %v307
    %v365 = vpop.f32.mrb[0].mxu0
    %v366 = vadd.f32 0.0, %v365
    %v367 = vpop.f32.mrb[0].mxu0
    %v368 = vadd.f32 0.0, %v367
    %v369 = vpop.f32.mrb[0].mxu0
    %v370 = vadd.f32 0.0, %v369
    %v371 = vpop.f32.mrb[0].mxu0
    %v372 = vadd.f32 0.0, %v371
    %373 = vmatprep.mubr.bf16.mxu0 0
    %374 = vmatmul.mubr.bf16.gmra.mrb[0].mxu0 %v310
    %v375 = vpop.f32.mrb[0].mxu0
    %v376 = vadd.f32 0.0, %v375
    %v377 = vpop.f32.mrb[0].mxu0
    %v378 = vadd.f32 0.0, %v377
    %v379 = vpop.f32.mrb[0].mxu0
    %v380 = vadd.f32 0.0, %v379
    %v381 = vpop.f32.mrb[0].mxu0
    %v382 = vadd.f32 0.0, %v381
    %383 = vmatprep.mubr.bf16.mxu0 0
    %384 = vmatmul.mubr.bf16.gmra.mrb[0].mxu0 %v313
    %v385 = vpop.f32.mrb[0].mxu0
    %v386 = vadd.f32 0.0, %v385
    %v387 = vpop.f32.mrb[0].mxu0
    %v388 = vadd.f32 0.0, %v387
    %v389 = vpop.f32.mrb[0].mxu0
    %v390 = vadd.f32 0.0, %v389
    %v391 = vpop.f32.mrb[0].mxu0
    %v392 = vadd.f32 0.0, %v391
    %393 = vmatprep.mubr.bf16.mxu0 0
    %394 = vmatmul.mubr.bf16.gmra.mrb[0].mxu0 %v316
    %v395 = vpop.f32.mrb[0].mxu0
    %v396 = vadd.f32 0.0, %v395
    %v397 = vpop.f32.mrb[0].mxu0
    %v398 = vadd.f32 0.0, %v397
    %v399 = vpop.f32.mrb[0].mxu0
    %v400 = vadd.f32 0.0, %v399
    %v401 = vpop.f32.mrb[0].mxu0
    %v402 = vadd.f32 0.0, %v401
    %403 = vmatprep.mubr.bf16.mxu0 0
    %404 = vmatmul.mubr.bf16.gmra.mrb[0].mxu0 %v319
    %v405 = vpop.f32.mrb[0].mxu0
    %v406 = vadd.f32 0.0, %v405
    %v407 = vpop.f32.mrb[0].mxu0
    %v408 = vadd.f32 0.0, %v407
    %v409 = vpop.f32.mrb[0].mxu0
    %v410 = vadd.f32 0.0, %v409
    %v411 = vpop.f32.mrb[0].mxu0
    %v412 = vadd.f32 0.0, %v411
    %413 = vdwg.mxu0
    %vm414 = vcmp.gt.bf16.partialorder %v52, 1069563840
    %vm415 = vcmp.gt.bf16.partialorder %v53, 1069563840
    %vm416 = vcmp.gt.bf16.partialorder %v54, 1069563840
    %vm417 = vcmp.gt.bf16.partialorder %v55, 1069563840
    %vm418 = vcmp.gt.bf16.partialorder %v56, 1069563840
    %vm419 = vcmp.gt.bf16.partialorder %v57, 1069563840
    %vm420 = vcmp.gt.bf16.partialorder %v58, 1069563840
    %vm421 = vcmp.gt.bf16.partialorder %v59, 1069563840
    %vm422 = vcmp.gt.bf16.partialorder %v60, 1069563840
    %vm423 = vcmp.gt.bf16.partialorder %v61, 1069563840
    %vm424 = vcmp.gt.bf16.partialorder %v62, 1069563840
    %vm425 = vcmp.gt.bf16.partialorder %v63, 1069563840
    %v426 = vsel %vm414, 65537, 0
    %v427 = vsel %vm415, 65537, 0
    %v428 = vsel %vm416, 65537, 0
    %v429 = vsel %vm417, 65537, 0
    %v430 = vsel %vm418, 65537, 0
    %v431 = vsel %vm419, 65537, 0
    %v432 = vsel %vm420, 65537, 0
    %v433 = vsel %vm421, 65537, 0
    %v434 = vsel %vm422, 65537, 0
    %v435 = vsel %vm423, 65537, 0
    %v436 = vsel %vm424, 65537, 0
    %v437 = vsel %vm425, 65537, 0
    %v438 = vunpack.c.l.b16 %v426
    %v439 = vunpack.c.h.b16 %v426
    %v440 = vunpack.c.l.b16 %v427
    %v441 = vunpack.c.h.b16 %v427
    %v442 = vunpack.c.l.b16 %v428
    %v443 = vunpack.c.h.b16 %v428
    %v444 = vunpack.c.l.b16 %v429
    %v445 = vunpack.c.h.b16 %v429
    %v446 = vunpack.c.l.b16 %v430
    %v447 = vunpack.c.h.b16 %v430
    %v448 = vunpack.c.l.b16 %v431
    %v449 = vunpack.c.h.b16 %v431
    %v450 = vunpack.c.l.b16 %v432
    %v451 = vunpack.c.h.b16 %v432
    %v452 = vunpack.c.l.b16 %v433
    %v453 = vunpack.c.h.b16 %v433
    %v454 = vunpack.c.l.b16 %v434
    %v455 = vunpack.c.h.b16 %v434
    %v456 = vunpack.c.l.b16 %v435
    %v457 = vunpack.c.h.b16 %v435
    %v458 = vunpack.c.l.b16 %v436
    %v459 = vunpack.c.h.b16 %v436
    %v460 = vunpack.c.l.b16 %v437
    %v461 = vunpack.c.h.b16 %v437
    %vm462 = vcmp.ne.s32.totalorder %v438, 0
    %vm463 = vcmp.ne.s32.totalorder %v439, 0
    %vm464 = vcmp.ne.s32.totalorder %v440, 0
    %vm465 = vcmp.ne.s32.totalorder %v441, 0
    %vm466 = vcmp.ne.s32.totalorder %v442, 0
    %vm467 = vcmp.ne.s32.totalorder %v443, 0
    %vm468 = vcmp.ne.s32.totalorder %v444, 0
    %vm469 = vcmp.ne.s32.totalorder %v445, 0
    %vm470 = vcmp.ne.s32.totalorder %v446, 0
    %vm471 = vcmp.ne.s32.totalorder %v447, 0
    %vm472 = vcmp.ne.s32.totalorder %v448, 0
    %vm473 = vcmp.ne.s32.totalorder %v449, 0
    %vm474 = vcmp.ne.s32.totalorder %v450, 0
    %vm475 = vcmp.ne.s32.totalorder %v451, 0
    %vm476 = vcmp.ne.s32.totalorder %v452, 0
    %vm477 = vcmp.ne.s32.totalorder %v453, 0
    %vm478 = vcmp.ne.s32.totalorder %v454, 0
    %vm479 = vcmp.ne.s32.totalorder %v455, 0
    %vm480 = vcmp.ne.s32.totalorder %v456, 0
    %vm481 = vcmp.ne.s32.totalorder %v457, 0
    %vm482 = vcmp.ne.s32.totalorder %v458, 0
    %vm483 = vcmp.ne.s32.totalorder %v459, 0
    %vm484 = vcmp.ne.s32.totalorder %v460, 0
    %vm485 = vcmp.ne.s32.totalorder %v461, 0
    %v486 = vsel %vm462, %v356, 9e+15
    %v487 = vsel %vm463, %v358, 9e+15
    %v488 = vsel %vm464, %v360, 9e+15
    %v489 = vsel %vm465, %v362, 9e+15
    %v490 = vsel %vm466, %v366, 9e+15
    %v491 = vsel %vm467, %v368, 9e+15
    %v492 = vsel %vm468, %v370, 9e+15
    %v493 = vsel %vm469, %v372, 9e+15
    %v494 = vsel %vm470, %v376, 9e+15
    %v495 = vsel %vm471, %v378, 9e+15
    %v496 = vsel %vm472, %v380, 9e+15
    %v497 = vsel %vm473, %v382, 9e+15
    %v498 = vsel %vm474, %v386, 9e+15
    %v499 = vsel %vm475, %v388, 9e+15
    %v500 = vsel %vm476, %v390, 9e+15
    %v501 = vsel %vm477, %v392, 9e+15
    %v502 = vsel %vm478, %v396, 9e+15
    %v503 = vsel %vm479, %v398, 9e+15
    %v504 = vsel %vm480, %v400, 9e+15
    %v505 = vsel %vm481, %v402, 9e+15
    %v506 = vsel %vm482, %v406, 9e+15
    %v507 = vsel %vm483, %v408, 9e+15
    %v508 = vsel %vm484, %v410, 9e+15
    %v509 = vsel %vm485, %v412, 9e+15
    %v510 = vsel %vm462, %v356, -9e+15
    %v511 = vsel %vm463, %v358, -9e+15
    %v512 = vsel %vm464, %v360, -9e+15
    %v513 = vsel %vm465, %v362, -9e+15
    %v514 = vsel %vm466, %v366, -9e+15
    %v515 = vsel %vm467, %v368, -9e+15
    %v516 = vsel %vm468, %v370, -9e+15
    %v517 = vsel %vm469, %v372, -9e+15
    %v518 = vsel %vm470, %v376, -9e+15
    %v519 = vsel %vm471, %v378, -9e+15
    %v520 = vsel %vm472, %v380, -9e+15
    %v521 = vsel %vm473, %v382, -9e+15
    %v522 = vsel %vm474, %v386, -9e+15
    %v523 = vsel %vm475, %v388, -9e+15
    %v524 = vsel %vm476, %v390, -9e+15
    %v525 = vsel %vm477, %v392, -9e+15
    %v526 = vsel %vm478, %v396, -9e+15
    %v527 = vsel %vm479, %v398, -9e+15
    %v528 = vsel %vm480, %v400, -9e+15
    %v529 = vsel %vm481, %v402, -9e+15
    %v530 = vsel %vm482, %v406, -9e+15
    %v531 = vsel %vm483, %v408, -9e+15
    %v532 = vsel %vm484, %v410, -9e+15
    %v533 = vsel %vm485, %v412, -9e+15
    %vm534 = vcmask 523264
    %v535 = vsel %vm534, %v487, inf
    %v536 = vmin.f32 %v486, %v535
    %537 = vmin.xlane.f32.xlu0 %v536
    %v538 = vpop.xlane.xlu0 %537
    %v539 = vsel %vm534, %v489, inf
    %v540 = vmin.f32 %v488, %v539
    %541 = vmin.xlane.f32.xlu0 %v540
    %v542 = vpop.xlane.xlu0 %541
    %v543 = vsel %vm534, %v491, inf
    %v544 = vmin.f32 %v490, %v543
    %545 = vmin.xlane.f32.xlu0 %v544
    %v546 = vpop.xlane.xlu0 %545
    %v547 = vsel %vm534, %v493, inf
    %v548 = vmin.f32 %v492, %v547
    %549 = vmin.xlane.f32.xlu0 %v548
    %v550 = vpop.xlane.xlu0 %549
    %v551 = vsel %vm534, %v495, inf
    %v552 = vmin.f32 %v494, %v551
    %553 = vmin.xlane.f32.xlu0 %v552
    %v554 = vpop.xlane.xlu0 %553
    %v555 = vsel %vm534, %v497, inf
    %v556 = vmin.f32 %v496, %v555
    %557 = vmin.xlane.f32.xlu0 %v556
    %v558 = vpop.xlane.xlu0 %557
    %v559 = vsel %vm534, %v499, inf
    %v560 = vmin.f32 %v498, %v559
    %561 = vmin.xlane.f32.xlu0 %v560
    %v562 = vpop.xlane.xlu0 %561
    %v563 = vsel %vm534, %v501, inf
    %v564 = vmin.f32 %v500, %v563
    %565 = vmin.xlane.f32.xlu0 %v564
    %v566 = vpop.xlane.xlu0 %565
    %v567 = vsel %vm534, %v503, inf
    %v568 = vmin.f32 %v502, %v567
    %569 = vmin.xlane.f32.xlu0 %v568
    %v570 = vpop.xlane.xlu0 %569
    %v571 = vsel %vm534, %v505, inf
    %v572 = vmin.f32 %v504, %v571
    %573 = vmin.xlane.f32.xlu0 %v572
    %v574 = vpop.xlane.xlu0 %573
    %v575 = vsel %vm534, %v507, inf
    %v576 = vmin.f32 %v506, %v575
    %577 = vmin.xlane.f32.xlu0 %v576
    %v578 = vpop.xlane.xlu0 %577
    %v579 = vsel %vm534, %v509, inf
    %v580 = vmin.f32 %v508, %v579
    %581 = vmin.xlane.f32.xlu0 %v580
    %v582 = vpop.xlane.xlu0 %581
    %v583 = vsel %vm534, %v511, -inf
    %v584 = vmax.f32 %v510, %v583
    %585 = vmax.xlane.f32.xlu0 %v584
    %v586 = vpop.xlane.xlu0 %585
    %v587 = vsel %vm534, %v513, -inf
    %v588 = vmax.f32 %v512, %v587
    %589 = vmax.xlane.f32.xlu0 %v588
    %v590 = vpop.xlane.xlu0 %589
    %v591 = vsel %vm534, %v515, -inf
    %v592 = vmax.f32 %v514, %v591
    %593 = vmax.xlane.f32.xlu0 %v592
    %v594 = vpop.xlane.xlu0 %593
    %v595 = vsel %vm534, %v517, -inf
    %v596 = vmax.f32 %v516, %v595
    %597 = vmax.xlane.f32.xlu0 %v596
    %v598 = vpop.xlane.xlu0 %597
    %v599 = vsel %vm534, %v519, -inf
    %v600 = vmax.f32 %v518, %v599
    %601 = vmax.xlane.f32.xlu0 %v600
    %v602 = vpop.xlane.xlu0 %601
    %v603 = vsel %vm534, %v521, -inf
    %v604 = vmax.f32 %v520, %v603
    %605 = vmax.xlane.f32.xlu0 %v604
    %v606 = vpop.xlane.xlu0 %605
    %v607 = vsel %vm534, %v523, -inf
    %v608 = vmax.f32 %v522, %v607
    %609 = vmax.xlane.f32.xlu0 %v608
    %v610 = vpop.xlane.xlu0 %609
    %v611 = vsel %vm534, %v525, -inf
    %v612 = vmax.f32 %v524, %v611
    %613 = vmax.xlane.f32.xlu0 %v612
    %v614 = vpop.xlane.xlu0 %613
    %v615 = vsel %vm534, %v527, -inf
    %v616 = vmax.f32 %v526, %v615
    %617 = vmax.xlane.f32.xlu0 %v616
    %v618 = vpop.xlane.xlu0 %617
    %v619 = vsel %vm534, %v529, -inf
    %v620 = vmax.f32 %v528, %v619
    %621 = vmax.xlane.f32.xlu0 %v620
    %v622 = vpop.xlane.xlu0 %621
    %v623 = vsel %vm534, %v531, -inf
    %v624 = vmax.f32 %v530, %v623
    %625 = vmax.xlane.f32.xlu0 %v624
    %v626 = vpop.xlane.xlu0 %625
    %v627 = vsel %vm534, %v533, -inf
    %v628 = vmax.f32 %v532, %v627
    %629 = vmax.xlane.f32.xlu0 %v628
    %v630 = vpop.xlane.xlu0 %629
    %v631 = vsub.f32 %v586, %v538
    %v632 = vsub.f32 %v590, %v542
    %v633 = vsub.f32 %v594, %v546
    %v634 = vsub.f32 %v598, %v550
    %v635 = vsub.f32 %v602, %v554
    %v636 = vsub.f32 %v606, %v558
    %v637 = vsub.f32 %v610, %v562
    %v638 = vsub.f32 %v614, %v566
    %v639 = vsub.f32 %v618, %v570
    %v640 = vsub.f32 %v622, %v574
    %v641 = vsub.f32 %v626, %v578
    %v642 = vsub.f32 %v630, %v582
    %vm643 = vcmp.eq.f32.partialorder %v631, 0.0
    %vm644 = vcmp.eq.f32.partialorder %v632, 0.0
    %vm645 = vcmp.eq.f32.partialorder %v633, 0.0
    %vm646 = vcmp.eq.f32.partialorder %v634, 0.0
    %vm647 = vcmp.eq.f32.partialorder %v635, 0.0
    %vm648 = vcmp.eq.f32.partialorder %v636, 0.0
    %vm649 = vcmp.eq.f32.partialorder %v637, 0.0
    %vm650 = vcmp.eq.f32.partialorder %v638, 0.0
    %vm651 = vcmp.eq.f32.partialorder %v639, 0.0
    %vm652 = vcmp.eq.f32.partialorder %v640, 0.0
    %vm653 = vcmp.eq.f32.partialorder %v641, 0.0
    %vm654 = vcmp.eq.f32.partialorder %v642, 0.0
    %v655 = vsel %vm643, 1e-06, %v631
    %v656 = vsel %vm644, 1e-06, %v632
    %v657 = vsel %vm645, 1e-06, %v633
    %v658 = vsel %vm646, 1e-06, %v634
    %v659 = vsel %vm647, 1e-06, %v635
    %v660 = vsel %vm648, 1e-06, %v636
    %v661 = vsel %vm649, 1e-06, %v637
    %v662 = vsel %vm650, 1e-06, %v638
    %v663 = vsel %vm651, 1e-06, %v639
    %v664 = vsel %vm652, 1e-06, %v640
    %v665 = vsel %vm653, 1e-06, %v641
    %v666 = vsel %vm654, 1e-06, %v642
    %v667 = vsub.f32 %v356, %v538
    %v668 = vsub.f32 %v358, %v538
    %v669 = vsub.f32 %v360, %v542
    %v670 = vsub.f32 %v362, %v542
    %v671 = vsub.f32 %v366, %v546
    %v672 = vsub.f32 %v368, %v546
    %v673 = vsub.f32 %v370, %v550
    %v674 = vsub.f32 %v372, %v550
    %v675 = vsub.f32 %v376, %v554
    %v676 = vsub.f32 %v378, %v554
    %v677 = vsub.f32 %v380, %v558
    %v678 = vsub.f32 %v382, %v558
    %v679 = vsub.f32 %v386, %v562
    %v680 = vsub.f32 %v388, %v562
    %v681 = vsub.f32 %v390, %v566
    %v682 = vsub.f32 %v392, %v566
    %v683 = vsub.f32 %v396, %v570
    %v684 = vsub.f32 %v398, %v570
    %v685 = vsub.f32 %v400, %v574
    %v686 = vsub.f32 %v402, %v574
    %v687 = vsub.f32 %v406, %v578
    %v688 = vsub.f32 %v408, %v578
    %v689 = vsub.f32 %v410, %v582
    %v690 = vsub.f32 %v412, %v582
    %v691 = vrcp.pop %v655
    %v692 = vmul.f32 %v667, %v691
    %v693 = vmul.f32 %v668, %v691
    %v694 = vrcp.pop %v656
    %v695 = vmul.f32 %v669, %v694
    %v696 = vmul.f32 %v670, %v694
    %v697 = vrcp.pop %v657
    %v698 = vmul.f32 %v671, %v697
    %v699 = vmul.f32 %v672, %v697
    %v700 = vrcp.pop %v658
    %v701 = vmul.f32 %v673, %v700
    %v702 = vmul.f32 %v674, %v700
    %v703 = vrcp.pop %v659
    %v704 = vmul.f32 %v675, %v703
    %v705 = vmul.f32 %v676, %v703
    %v706 = vrcp.pop %v660
    %v707 = vmul.f32 %v677, %v706
    %v708 = vmul.f32 %v678, %v706
    %v709 = vrcp.pop %v661
    %v710 = vmul.f32 %v679, %v709
    %v711 = vmul.f32 %v680, %v709
    %v712 = vrcp.pop %v662
    %v713 = vmul.f32 %v681, %v712
    %v714 = vmul.f32 %v682, %v712
    %v715 = vrcp.pop %v663
    %v716 = vmul.f32 %v683, %v715
    %v717 = vmul.f32 %v684, %v715
    %v718 = vrcp.pop %v664
    %v719 = vmul.f32 %v685, %v718
    %v720 = vmul.f32 %v686, %v718
    %v721 = vrcp.pop %v665
    %v722 = vmul.f32 %v687, %v721
    %v723 = vmul.f32 %v688, %v721
    %v724 = vrcp.pop %v666
    %v725 = vmul.f32 %v689, %v724
    %v726 = vmul.f32 %v690, %v724
    %v727 = vsel %vm462, %v692, -9e+15
    %v728 = vsel %vm463, %v693, -9e+15
    %v729 = vsel %vm464, %v695, -9e+15
    %v730 = vsel %vm465, %v696, -9e+15
    %v731 = vsel %vm466, %v698, -9e+15
    %v732 = vsel %vm467, %v699, -9e+15
    %v733 = vsel %vm468, %v701, -9e+15
    %v734 = vsel %vm469, %v702, -9e+15
    %v735 = vsel %vm470, %v704, -9e+15
    %v736 = vsel %vm471, %v705, -9e+15
    %v737 = vsel %vm472, %v707, -9e+15
    %v738 = vsel %vm473, %v708, -9e+15
    %v739 = vsel %vm474, %v710, -9e+15
    %v740 = vsel %vm475, %v711, -9e+15
    %v741 = vsel %vm476, %v713, -9e+15
    %v742 = vsel %vm477, %v714, -9e+15
    %v743 = vsel %vm478, %v716, -9e+15
    %v744 = vsel %vm479, %v717, -9e+15
    %v745 = vsel %vm480, %v719, -9e+15
    %v746 = vsel %vm481, %v720, -9e+15
    %v747 = vsel %vm482, %v722, -9e+15
    %v748 = vsel %vm483, %v723, -9e+15
    %v749 = vsel %vm484, %v725, -9e+15
    %v750 = vsel %vm485, %v726, -9e+15
    %v751 = vsel %vm534, %v728, -inf
    %v752 = vmax.f32 %v727, %v751
    %753 = vmax.xlane.f32.xlu0 %v752
    %v754 = vpop.xlane.xlu0 %753
    %v755 = vsel %vm534, %v730, -inf
    %v756 = vmax.f32 %v729, %v755
    %757 = vmax.xlane.f32.xlu0 %v756
    %v758 = vpop.xlane.xlu0 %757
    %v759 = vsel %vm534, %v732, -inf
    %v760 = vmax.f32 %v731, %v759
    %761 = vmax.xlane.f32.xlu0 %v760
    %v762 = vpop.xlane.xlu0 %761
    %v763 = vsel %vm534, %v734, -inf
    %v764 = vmax.f32 %v733, %v763
    %765 = vmax.xlane.f32.xlu0 %v764
    %v766 = vpop.xlane.xlu0 %765
    %v767 = vsel %vm534, %v736, -inf
    %v768 = vmax.f32 %v735, %v767
    %769 = vmax.xlane.f32.xlu0 %v768
    %v770 = vpop.xlane.xlu0 %769
    %v771 = vsel %vm534, %v738, -inf
    %v772 = vmax.f32 %v737, %v771
    %773 = vmax.xlane.f32.xlu0 %v772
    %v774 = vpop.xlane.xlu0 %773
    %v775 = vsel %vm534, %v740, -inf
    %v776 = vmax.f32 %v739, %v775
    %777 = vmax.xlane.f32.xlu0 %v776
    %v778 = vpop.xlane.xlu0 %777
    %v779 = vsel %vm534, %v742, -inf
    %v780 = vmax.f32 %v741, %v779
    %781 = vmax.xlane.f32.xlu0 %v780
    %v782 = vpop.xlane.xlu0 %781
    %v783 = vsel %vm534, %v744, -inf
    %v784 = vmax.f32 %v743, %v783
    %785 = vmax.xlane.f32.xlu0 %v784
    %v786 = vpop.xlane.xlu0 %785
    %v787 = vsel %vm534, %v746, -inf
    %v788 = vmax.f32 %v745, %v787
    %789 = vmax.xlane.f32.xlu0 %v788
    %v790 = vpop.xlane.xlu0 %789
    %v791 = vsel %vm534, %v748, -inf
    %v792 = vmax.f32 %v747, %v791
    %793 = vmax.xlane.f32.xlu0 %v792
    %v794 = vpop.xlane.xlu0 %793
    %v795 = vsel %vm534, %v750, -inf
    %v796 = vmax.f32 %v749, %v795
    %797 = vmax.xlane.f32.xlu0 %v796
    %v798 = vpop.xlane.xlu0 %797
    %v799 = vsub.f32 %v727, %v754
    %v800 = vsub.f32 %v728, %v754
    %v801 = vsub.f32 %v729, %v758
    %v802 = vsub.f32 %v730, %v758
    %v803 = vsub.f32 %v731, %v762
    %v804 = vsub.f32 %v732, %v762
    %v805 = vsub.f32 %v733, %v766
    %v806 = vsub.f32 %v734, %v766
    %v807 = vsub.f32 %v735, %v770
    %v808 = vsub.f32 %v736, %v770
    %v809 = vsub.f32 %v737, %v774
    %v810 = vsub.f32 %v738, %v774
    %v811 = vsub.f32 %v739, %v778
    %v812 = vsub.f32 %v740, %v778
    %v813 = vsub.f32 %v741, %v782
    %v814 = vsub.f32 %v742, %v782
    %v815 = vsub.f32 %v743, %v786
    %v816 = vsub.f32 %v744, %v786
    %v817 = vsub.f32 %v745, %v790
    %v818 = vsub.f32 %v746, %v790
    %v819 = vsub.f32 %v747, %v794
    %v820 = vsub.f32 %v748, %v794
    %v821 = vsub.f32 %v749, %v798
    %v822 = vsub.f32 %v750, %v798
    %v823 = vmul.f32 %v799, 1.442695
    %v824 = vpow.pop %v823
    %v825 = vmul.f32 %v800, 1.442695
    %v826 = vpow.pop %v825
    %v827 = vmul.f32 %v801, 1.442695
    %v828 = vpow.pop %v827
    %v829 = vmul.f32 %v802, 1.442695
    %v830 = vpow.pop %v829
    %v831 = vmul.f32 %v803, 1.442695
    %v832 = vpow.pop %v831
    %v833 = vmul.f32 %v804, 1.442695
    %v834 = vpow.pop %v833
    %v835 = vmul.f32 %v805, 1.442695
    %v836 = vpow.pop %v835
    %v837 = vmul.f32 %v806, 1.442695
    %v838 = vpow.pop %v837
    %v839 = vmul.f32 %v807, 1.442695
    %v840 = vpow.pop %v839
    %v841 = vmul.f32 %v808, 1.442695
    %v842 = vpow.pop %v841
    %v843 = vmul.f32 %v809, 1.442695
    %v844 = vpow.pop %v843
    %v845 = vmul.f32 %v810, 1.442695
    %v846 = vpow.pop %v845
    %v847 = vmul.f32 %v811, 1.442695
    %v848 = vpow.pop %v847
    %v849 = vmul.f32 %v812, 1.442695
    %v850 = vpow.pop %v849
    %v851 = vmul.f32 %v813, 1.442695
    %v852 = vpow.pop %v851
    %v853 = vmul.f32 %v814, 1.442695
    %v854 = vpow.pop %v853
    %v855 = vmul.f32 %v815, 1.442695
    %v856 = vpow.pop %v855
    %v857 = vmul.f32 %v816, 1.442695
    %v858 = vpow.pop %v857
    %v859 = vmul.f32 %v817, 1.442695
    %v860 = vpow.pop %v859
    %v861 = vmul.f32 %v818, 1.442695
    %v862 = vpow.pop %v861
    %v863 = vmul.f32 %v819, 1.442695
    %v864 = vpow.pop %v863
    %v865 = vmul.f32 %v820, 1.442695
    %v866 = vpow.pop %v865
    %v867 = vmul.f32 %v821, 1.442695
    %v868 = vpow.pop %v867
    %v869 = vmul.f32 %v822, 1.442695
    %v870 = vpow.pop %v869
    %vm871 = vcmp.gt.bf16.partialorder %v52, 1056980736
    %vm872 = vcmp.gt.bf16.partialorder %v53, 1056980736
    %vm873 = vcmp.gt.bf16.partialorder %v54, 1056980736
    %vm874 = vcmp.gt.bf16.partialorder %v55, 1056980736
    %vm875 = vcmp.gt.bf16.partialorder %v56, 1056980736
    %vm876 = vcmp.gt.bf16.partialorder %v57, 1056980736
    %vm877 = vcmp.gt.bf16.partialorder %v58, 1056980736
    %vm878 = vcmp.gt.bf16.partialorder %v59, 1056980736
    %vm879 = vcmp.gt.bf16.partialorder %v60, 1056980736
    %vm880 = vcmp.gt.bf16.partialorder %v61, 1056980736
    %vm881 = vcmp.gt.bf16.partialorder %v62, 1056980736
    %vm882 = vcmp.gt.bf16.partialorder %v63, 1056980736
    %v883 = vsel %vm871, 65537, 0
    %v884 = vsel %vm872, 65537, 0
    %v885 = vsel %vm873, 65537, 0
    %v886 = vsel %vm874, 65537, 0
    %v887 = vsel %vm875, 65537, 0
    %v888 = vsel %vm876, 65537, 0
    %v889 = vsel %vm877, 65537, 0
    %v890 = vsel %vm878, 65537, 0
    %v891 = vsel %vm879, 65537, 0
    %v892 = vsel %vm880, 65537, 0
    %v893 = vsel %vm881, 65537, 0
    %v894 = vsel %vm882, 65537, 0
    %v895 = vunpack.c.l.b16 %v883
    %v896 = vunpack.c.h.b16 %v883
    %v897 = vunpack.c.l.b16 %v884
    %v898 = vunpack.c.h.b16 %v884
    %v899 = vunpack.c.l.b16 %v885
    %v900 = vunpack.c.h.b16 %v885
    %v901 = vunpack.c.l.b16 %v886
    %v902 = vunpack.c.h.b16 %v886
    %v903 = vunpack.c.l.b16 %v887
    %v904 = vunpack.c.h.b16 %v887
    %v905 = vunpack.c.l.b16 %v888
    %v906 = vunpack.c.h.b16 %v888
    %v907 = vunpack.c.l.b16 %v889
    %v908 = vunpack.c.h.b16 %v889
    %v909 = vunpack.c.l.b16 %v890
    %v910 = vunpack.c.h.b16 %v890
    %v911 = vunpack.c.l.b16 %v891
    %v912 = vunpack.c.h.b16 %v891
    %v913 = vunpack.c.l.b16 %v892
    %v914 = vunpack.c.h.b16 %v892
    %v915 = vunpack.c.l.b16 %v893
    %v916 = vunpack.c.h.b16 %v893
    %v917 = vunpack.c.l.b16 %v894
    %v918 = vunpack.c.h.b16 %v894
    %vm919 = vcmp.ne.s32.totalorder %v895, 0
    %vm920 = vcmp.ne.s32.totalorder %v896, 0
    %vm921 = vcmp.ne.s32.totalorder %v897, 0
    %vm922 = vcmp.ne.s32.totalorder %v898, 0
    %vm923 = vcmp.ne.s32.totalorder %v899, 0
    %vm924 = vcmp.ne.s32.totalorder %v900, 0
    %vm925 = vcmp.ne.s32.totalorder %v901, 0
    %vm926 = vcmp.ne.s32.totalorder %v902, 0
    %vm927 = vcmp.ne.s32.totalorder %v903, 0
    %vm928 = vcmp.ne.s32.totalorder %v904, 0
    %vm929 = vcmp.ne.s32.totalorder %v905, 0
    %vm930 = vcmp.ne.s32.totalorder %v906, 0
    %vm931 = vcmp.ne.s32.totalorder %v907, 0
    %vm932 = vcmp.ne.s32.totalorder %v908, 0
    %vm933 = vcmp.ne.s32.totalorder %v909, 0
    %vm934 = vcmp.ne.s32.totalorder %v910, 0
    %vm935 = vcmp.ne.s32.totalorder %v911, 0
    %vm936 = vcmp.ne.s32.totalorder %v912, 0
    %vm937 = vcmp.ne.s32.totalorder %v913, 0
    %vm938 = vcmp.ne.s32.totalorder %v914, 0
    %vm939 = vcmp.ne.s32.totalorder %v915, 0
    %vm940 = vcmp.ne.s32.totalorder %v916, 0
    %vm941 = vcmp.ne.s32.totalorder %v917, 0
    %vm942 = vcmp.ne.s32.totalorder %v918, 0
    %v943 = vsel %vm919, %v824, 0.0
    %v944 = vsel %vm920, %v826, 0.0
    %v945 = vsel %vm921, %v828, 0.0
    %v946 = vsel %vm922, %v830, 0.0
    %v947 = vsel %vm923, %v832, 0.0
    %v948 = vsel %vm924, %v834, 0.0
    %v949 = vsel %vm925, %v836, 0.0
    %v950 = vsel %vm926, %v838, 0.0
    %v951 = vsel %vm927, %v840, 0.0
    %v952 = vsel %vm928, %v842, 0.0
    %v953 = vsel %vm929, %v844, 0.0
    %v954 = vsel %vm930, %v846, 0.0
    %v955 = vsel %vm931, %v848, 0.0
    %v956 = vsel %vm932, %v850, 0.0
    %v957 = vsel %vm933, %v852, 0.0
    %v958 = vsel %vm934, %v854, 0.0
    %v959 = vsel %vm935, %v856, 0.0
    %v960 = vsel %vm936, %v858, 0.0
    %v961 = vsel %vm937, %v860, 0.0
    %v962 = vsel %vm938, %v862, 0.0
    %v963 = vsel %vm939, %v864, 0.0
    %v964 = vsel %vm940, %v866, 0.0
    %v965 = vsel %vm941, %v868, 0.0
    %v966 = vsel %vm942, %v870, 0.0
    %v967 = vsel %vm534, %v944, 0.0
    %v968 = vadd.f32 %v943, %v967
    %969 = vadd.xlane.f32.xlu0 %v968
    %v970 = vpop.xlane.xlu0 %969
    %v971 = vsel %vm534, %v946, 0.0
    %v972 = vadd.f32 %v945, %v971
    %973 = vadd.xlane.f32.xlu0 %v972
    %v974 = vpop.xlane.xlu0 %973
    %v975 = vsel %vm534, %v948, 0.0
    %v976 = vadd.f32 %v947, %v975
    %977 = vadd.xlane.f32.xlu0 %v976
    %v978 = vpop.xlane.xlu0 %977
    %v979 = vsel %vm534, %v950, 0.0
    %v980 = vadd.f32 %v949, %v979
    %981 = vadd.xlane.f32.xlu0 %v980
    %v982 = vpop.xlane.xlu0 %981
    %v983 = vsel %vm534, %v952, 0.0
    %v984 = vadd.f32 %v951, %v983
    %985 = vadd.xlane.f32.xlu0 %v984
    %v986 = vpop.xlane.xlu0 %985
    %v987 = vsel %vm534, %v954, 0.0
    %v988 = vadd.f32 %v953, %v987
    %989 = vadd.xlane.f32.xlu0 %v988
    %v990 = vpop.xlane.xlu0 %989
    %v991 = vsel %vm534, %v956, 0.0
    %v992 = vadd.f32 %v955, %v991
    %993 = vadd.xlane.f32.xlu0 %v992
    %v994 = vpop.xlane.xlu0 %993
    %v995 = vsel %vm534, %v958, 0.0
    %v996 = vadd.f32 %v957, %v995
    %997 = vadd.xlane.f32.xlu0 %v996
    %v998 = vpop.xlane.xlu0 %997
    %v999 = vsel %vm534, %v960, 0.0
    %v1000 = vadd.f32 %v959, %v999
    %1001 = vadd.xlane.f32.xlu0 %v1000
    %v1002 = vpop.xlane.xlu0 %1001
    %v1003 = vsel %vm534, %v962, 0.0
    %v1004 = vadd.f32 %v961, %v1003
    %1005 = vadd.xlane.f32.xlu0 %v1004
    %v1006 = vpop.xlane.xlu0 %1005
    %v1007 = vsel %vm534, %v964, 0.0
    %v1008 = vadd.f32 %v963, %v1007
    %1009 = vadd.xlane.f32.xlu0 %v1008
    %v1010 = vpop.xlane.xlu0 %1009
    %v1011 = vsel %vm534, %v966, 0.0
    %v1012 = vadd.f32 %v965, %v1011
    %1013 = vadd.xlane.f32.xlu0 %v1012
    %v1014 = vpop.xlane.xlu0 %1013
    %v1015 = vrcp.pop %v970
    %v1016 = vrcp.pop %v974
    %v1017 = vrcp.pop %v978
    %v1018 = vrcp.pop %v982
    %v1019 = vrcp.pop %v986
    %v1020 = vrcp.pop %v990
    %v1021 = vrcp.pop %v994
    %v1022 = vrcp.pop %v998
    %v1023 = vrcp.pop %v1002
    %v1024 = vrcp.pop %v1006
    %v1025 = vrcp.pop %v1010
    %v1026 = vrcp.pop %v1014
    %v1027 = vmul.f32 %v943, %v1015
    %v1028 = vmul.f32 %v944, %v1015
    %v1029 = vmul.f32 %v945, %v1016
    %v1030 = vmul.f32 %v946, %v1016
    %v1031 = vmul.f32 %v947, %v1017
    %v1032 = vmul.f32 %v948, %v1017
    %v1033 = vmul.f32 %v949, %v1018
    %v1034 = vmul.f32 %v950, %v1018
    %v1035 = vmul.f32 %v951, %v1019
    %v1036 = vmul.f32 %v952, %v1019
    %v1037 = vmul.f32 %v953, %v1020
    %v1038 = vmul.f32 %v954, %v1020
    %v1039 = vmul.f32 %v955, %v1021
    %v1040 = vmul.f32 %v956, %v1021
    %v1041 = vmul.f32 %v957, %v1022
    %v1042 = vmul.f32 %v958, %v1022
    %v1043 = vmul.f32 %v959, %v1023
    %v1044 = vmul.f32 %v960, %v1023
    %v1045 = vmul.f32 %v961, %v1024
    %v1046 = vmul.f32 %v962, %v1024
    %v1047 = vmul.f32 %v963, %v1025
    %v1048 = vmul.f32 %v964, %v1025
    %v1049 = vmul.f32 %v965, %v1026
    %v1050 = vmul.f32 %v966, %v1026
    %v1051 = vpack.c.bf16 %v149, %v149
    %v1052 = vpack.c.bf16 %v1029, %v1027
    %v1053 = vpack.c.bf16 %v1030, %v1028
    %v1054 = vpack.c.bf16 %v1033, %v1031
    %v1055 = vpack.c.bf16 %v1034, %v1032
    %v1056 = vpack.c.bf16 %v1037, %v1035
    %v1057 = vpack.c.bf16 %v1038, %v1036
    %v1058 = vpack.c.bf16 %v1041, %v1039
    %v1059 = vpack.c.bf16 %v1042, %v1040
    %v1060 = vpack.c.bf16 %v1045, %v1043
    %v1061 = vpack.c.bf16 %v1046, %v1044
    %v1062 = vpack.c.bf16 %v1049, %v1047
    %v1063 = vpack.c.bf16 %v1050, %v1048
    %vm1064 = vcmask 785408
    %v1066 = vsel %vm1064, %v1051, 0
    %1068 = vmatprep.subr.bf16.mxu0 %v1053
    %1069 = vmatpush1.bf16.msra.mxu0 %v1052
    %1070 = vmatprep.subr.bf16.mxu0 %v1055
    %1071 = vmatpush1.bf16.msra.mxu0 %v1054
    %1072 = vmatprep.subr.bf16.mxu0 %v1057
    %1073 = vmatpush1.bf16.msra.mxu0 %v1056
    %1074 = vmatprep.subr.bf16.mxu0 %v1059
    %1075 = vmatpush1.bf16.msra.mxu0 %v1058
    %1076 = vmatprep.subr.bf16.mxu0 %v1061
    %1077 = vmatpush1.bf16.msra.mxu0 %v1060
    %1078 = vmatprep.subr.bf16.mxu0 %v1063
    %1079 = vmatpush1.bf16.msra.mxu0 %v1062
    %1080 = vmatprep.subr.bf16.mxu0 0
    %1081 = vmatpush1.bf16.msra.mxu0 0
    %1082 = vmatprep.subr.bf16.mxu0 0
    %1083 = vmatpush1.bf16.msra.mxu0 0
    %1084 = vmatprep.subr.bf16.mxu0 0
    %1085 = vmatpush1.bf16.msra.mxu0 0
    %1086 = vmatprep.subr.bf16.mxu0 0
    %1087 = vmatpush1.bf16.msra.mxu0 0
    %1088 = vmatprep.subr.bf16.mxu0 0
    %1089 = vmatpush1.bf16.msra.mxu0 0
    %1090 = vmatprep.subr.bf16.mxu0 0
    %1091 = vmatpush1.bf16.msra.mxu0 0
    %1092 = vmatprep.subr.bf16.mxu0 0
    %1093 = vmatpush1.bf16.msra.mxu0 0
    %1094 = vmatprep.subr.bf16.mxu0 0
    %1095 = vmatpush1.bf16.msra.mxu0 0
    %1096 = vmatprep.subr.bf16.mxu0 0
    %1097 = vmatpush1.bf16.msra.mxu0 0
    %1098 = vmatprep.subr.bf16.mxu0 0
    %1099 = vmatpush1.bf16.msra.mxu0 0
    %1100 = vmatprep.mubr.bf16.mxu0 0
    %1101 = vmatmul.mubr.bf16.gmra.mrb[0].mxu0 %v1066
    %v1102 = vpop.f32.mrb[0].mxu0
    %v1103 = vadd.f32 0.0, %v1102
    %v1104 = vpop.f32.mrb[0].mxu0
    %v1105 = vadd.f32 0.0, %v1104
    %v1106 = vpop.f32.mrb[0].mxu0
    %v1107 = vpop.f32.mrb[0].mxu0
    %1108 = vdwg.mxu0
    %1115 = vrot.lane.b32.xlu0 %v286, 112
    %v1116 = vpop.permute.xlu0 %1115
    %1117 = vrot.lane.b32.xlu0 %v287, 112
    %v1118 = vpop.permute.xlu0 %1117
    %1119 = vrot.lane.b32.xlu0 %v288, 112
    %v1120 = vpop.permute.xlu0 %1119
    %1121 = vrot.lane.b32.xlu0 %v289, 112
    %v1122 = vpop.permute.xlu0 %1121
    %1123 = vrot.lane.b32.xlu0 %v290, 112
    %v1124 = vpop.permute.xlu0 %1123
    %1125 = vrot.lane.b32.xlu0 %v291, 112
    %v1126 = vpop.permute.xlu0 %1125
    %v1128 = vsel %vm302, %v1116, 0
    %v1131 = vsel %vm302, %v1118, 0
    %v1134 = vsel %vm302, %v1120, 0
    %v1137 = vsel %vm302, %v1122, 0
    %v1140 = vsel %vm302, %v1124, 0
    %v1143 = vsel %vm302, %v1126, 0
    %1145 = vmatprep.subr.bf16.mxu0 %v299
    %1146 = vmatpush1.bf16.msra.mxu0 %v298
    %1147 = vmatprep.subr.bf16.mxu0 0
    %1148 = vmatpush1.bf16.msra.mxu0 0
    %1149 = vmatprep.subr.bf16.mxu0 0
    %1150 = vmatpush1.bf16.msra.mxu0 0
    %1151 = vmatprep.subr.bf16.mxu0 0
    %1152 = vmatpush1.bf16.msra.mxu0 0
    %1153 = vmatprep.subr.bf16.mxu0 0
    %1154 = vmatpush1.bf16.msra.mxu0 0
    %1155 = vmatprep.subr.bf16.mxu0 0
    %1156 = vmatpush1.bf16.msra.mxu0 0
    %1157 = vmatprep.subr.bf16.mxu0 0
    %1158 = vmatpush1.bf16.msra.mxu0 0
    %1159 = vmatprep.subr.bf16.mxu0 0
    %1160 = vmatpush1.bf16.msra.mxu0 0
    %1161 = vmatprep.subr.bf16.mxu0 0
    %1162 = vmatpush1.bf16.msra.mxu0 0
    %1163 = vmatprep.subr.bf16.mxu0 0
    %1164 = vmatpush1.bf16.msra.mxu0 0
    %1165 = vmatprep.subr.bf16.mxu0 0
    %1166 = vmatpush1.bf16.msra.mxu0 0
    %1167 = vmatprep.subr.bf16.mxu0 0
    %1168 = vmatpush1.bf16.msra.mxu0 0
    %1169 = vmatprep.subr.bf16.mxu0 0
    %1170 = vmatpush1.bf16.msra.mxu0 0
    %1171 = vmatprep.subr.bf16.mxu0 0
    %1172 = vmatpush1.bf16.msra.mxu0 0
    %1173 = vmatprep.subr.bf16.mxu0 0
    %1174 = vmatpush1.bf16.msra.mxu0 0
    %1175 = vmatprep.subr.bf16.mxu0 0
    %1176 = vmatpush1.bf16.msra.mxu0 0
    %1177 = vmatprep.mubr.bf16.mxu0 0
    %1178 = vmatmul.mubr.bf16.gmra.mrb[0].mxu0 %v1128
    %v1179 = vpop.f32.mrb[0].mxu0
    %v1180 = vadd.f32 0.0, %v1179
    %v1181 = vpop.f32.mrb[0].mxu0
    %v1182 = vadd.f32 0.0, %v1181
    %v1183 = vpop.f32.mrb[0].mxu0
    %v1184 = vadd.f32 0.0, %v1183
    %v1185 = vpop.f32.mrb[0].mxu0
    %v1186 = vadd.f32 0.0, %v1185
    %1187 = vmatprep.mubr.bf16.mxu0 0
    %1188 = vmatmul.mubr.bf16.gmra.mrb[0].mxu0 %v1131
    %v1189 = vpop.f32.mrb[0].mxu0
    %v1190 = vadd.f32 0.0, %v1189
    %v1191 = vpop.f32.mrb[0].mxu0
    %v1192 = vadd.f32 0.0, %v1191
    %v1193 = vpop.f32.mrb[0].mxu0
    %v1194 = vadd.f32 0.0, %v1193
    %v1195 = vpop.f32.mrb[0].mxu0
    %v1196 = vadd.f32 0.0, %v1195
    %1197 = vmatprep.mubr.bf16.mxu0 0
    %1198 = vmatmul.mubr.bf16.gmra.mrb[0].mxu0 %v1134
    %v1199 = vpop.f32.mrb[0].mxu0
    %v1200 = vadd.f32 0.0, %v1199
    %v1201 = vpop.f32.mrb[0].mxu0
    %v1202 = vadd.f32 0.0, %v1201
    %v1203 = vpop.f32.mrb[0].mxu0
    %v1204 = vadd.f32 0.0, %v1203
    %v1205 = vpop.f32.mrb[0].mxu0
    %v1206 = vadd.f32 0.0, %v1205
    %1207 = vmatprep.mubr.bf16.mxu0 0
    %1208 = vmatmul.mubr.bf16.gmra.mrb[0].mxu0 %v1137
    %v1209 = vpop.f32.mrb[0].mxu0
    %v1210 = vadd.f32 0.0, %v1209
    %v1211 = vpop.f32.mrb[0].mxu0
    %v1212 = vadd.f32 0.0, %v1211
    %v1213 = vpop.f32.mrb[0].mxu0
    %v1214 = vadd.f32 0.0, %v1213
    %v1215 = vpop.f32.mrb[0].mxu0
    %v1216 = vadd.f32 0.0, %v1215
    %1217 = vmatprep.mubr.bf16.mxu0 0
    %1218 = vmatmul.mubr.bf16.gmra.mrb[0].mxu0 %v1140
    %v1219 = vpop.f32.mrb[0].mxu0
    %v1220 = vadd.f32 0.0, %v1219
    %v1221 = vpop.f32.mrb[0].mxu0
    %v1222 = vadd.f32 0.0, %v1221
    %v1223 = vpop.f32.mrb[0].mxu0
    %v1224 = vadd.f32 0.0, %v1223
    %v1225 = vpop.f32.mrb[0].mxu0
    %v1226 = vadd.f32 0.0, %v1225
    %1227 = vmatprep.mubr.bf16.mxu0 0
    %1228 = vmatmul.mubr.bf16.gmra.mrb[0].mxu0 %v1143
    %v1229 = vpop.f32.mrb[0].mxu0
    %v1230 = vadd.f32 0.0, %v1229
    %v1231 = vpop.f32.mrb[0].mxu0
    %v1232 = vadd.f32 0.0, %v1231
    %v1233 = vpop.f32.mrb[0].mxu0
    %v1234 = vadd.f32 0.0, %v1233
    %v1235 = vpop.f32.mrb[0].mxu0
    %v1236 = vadd.f32 0.0, %v1235
    %1237 = vdwg.mxu0
    %v1238 = vsel %vm462, %v1180, 9e+15
    %v1239 = vsel %vm463, %v1182, 9e+15
    %v1240 = vsel %vm464, %v1184, 9e+15
    %v1241 = vsel %vm465, %v1186, 9e+15
    %v1242 = vsel %vm466, %v1190, 9e+15
    %v1243 = vsel %vm467, %v1192, 9e+15
    %v1244 = vsel %vm468, %v1194, 9e+15
    %v1245 = vsel %vm469, %v1196, 9e+15
    %v1246 = vsel %vm470, %v1200, 9e+15
    %v1247 = vsel %vm471, %v1202, 9e+15
    %v1248 = vsel %vm472, %v1204, 9e+15
    %v1249 = vsel %vm473, %v1206, 9e+15
    %v1250 = vsel %vm474, %v1210, 9e+15
    %v1251 = vsel %vm475, %v1212, 9e+15
    %v1252 = vsel %vm476, %v1214, 9e+15
    %v1253 = vsel %vm477, %v1216, 9e+15
    %v1254 = vsel %vm478, %v1220, 9e+15
    %v1255 = vsel %vm479, %v1222, 9e+15
    %v1256 = vsel %vm480, %v1224, 9e+15
    %v1257 = vsel %vm481, %v1226, 9e+15
    %v1258 = vsel %vm482, %v1230, 9e+15
    %v1259 = vsel %vm483, %v1232, 9e+15
    %v1260 = vsel %vm484, %v1234, 9e+15
    %v1261 = vsel %vm485, %v1236, 9e+15
    %v1262 = vsel %vm462, %v1180, -9e+15
    %v1263 = vsel %vm463, %v1182, -9e+15
    %v1264 = vsel %vm464, %v1184, -9e+15
    %v1265 = vsel %vm465, %v1186, -9e+15
    %v1266 = vsel %vm466, %v1190, -9e+15
    %v1267 = vsel %vm467, %v1192, -9e+15
    %v1268 = vsel %vm468, %v1194, -9e+15
    %v1269 = vsel %vm469, %v1196, -9e+15
    %v1270 = vsel %vm470, %v1200, -9e+15
    %v1271 = vsel %vm471, %v1202, -9e+15
    %v1272 = vsel %vm472, %v1204, -9e+15
    %v1273 = vsel %vm473, %v1206, -9e+15
    %v1274 = vsel %vm474, %v1210, -9e+15
    %v1275 = vsel %vm475, %v1212, -9e+15
    %v1276 = vsel %vm476, %v1214, -9e+15
    %v1277 = vsel %vm477, %v1216, -9e+15
    %v1278 = vsel %vm478, %v1220, -9e+15
    %v1279 = vsel %vm479, %v1222, -9e+15
    %v1280 = vsel %vm480, %v1224, -9e+15
    %v1281 = vsel %vm481, %v1226, -9e+15
    %v1282 = vsel %vm482, %v1230, -9e+15
    %v1283 = vsel %vm483, %v1232, -9e+15
    %v1284 = vsel %vm484, %v1234, -9e+15
    %v1285 = vsel %vm485, %v1236, -9e+15
    %v1286 = vsel %vm534, %v1239, inf
    %v1287 = vmin.f32 %v1238, %v1286
    %1288 = vmin.xlane.f32.xlu0 %v1287
    %v1289 = vpop.xlane.xlu0 %1288
    %v1290 = vsel %vm534, %v1241, inf
    %v1291 = vmin.f32 %v1240, %v1290
    %1292 = vmin.xlane.f32.xlu0 %v1291
    %v1293 = vpop.xlane.xlu0 %1292
    %v1294 = vsel %vm534, %v1243, inf
    %v1295 = vmin.f32 %v1242, %v1294
    %1296 = vmin.xlane.f32.xlu0 %v1295
    %v1297 = vpop.xlane.xlu0 %1296
    %v1298 = vsel %vm534, %v1245, inf
    %v1299 = vmin.f32 %v1244, %v1298
    %1300 = vmin.xlane.f32.xlu0 %v1299
    %v1301 = vpop.xlane.xlu0 %1300
    %v1302 = vsel %vm534, %v1247, inf
    %v1303 = vmin.f32 %v1246, %v1302
    %1304 = vmin.xlane.f32.xlu0 %v1303
    %v1305 = vpop.xlane.xlu0 %1304
    %v1306 = vsel %vm534, %v1249, inf
    %v1307 = vmin.f32 %v1248, %v1306
    %1308 = vmin.xlane.f32.xlu0 %v1307
    %v1309 = vpop.xlane.xlu0 %1308
    %v1310 = vsel %vm534, %v1251, inf
    %v1311 = vmin.f32 %v1250, %v1310
    %1312 = vmin.xlane.f32.xlu0 %v1311
    %v1313 = vpop.xlane.xlu0 %1312
    %v1314 = vsel %vm534, %v1253, inf
    %v1315 = vmin.f32 %v1252, %v1314
    %1316 = vmin.xlane.f32.xlu0 %v1315
    %v1317 = vpop.xlane.xlu0 %1316
    %v1318 = vsel %vm534, %v1255, inf
    %v1319 = vmin.f32 %v1254, %v1318
    %1320 = vmin.xlane.f32.xlu0 %v1319
    %v1321 = vpop.xlane.xlu0 %1320
    %v1322 = vsel %vm534, %v1257, inf
    %v1323 = vmin.f32 %v1256, %v1322
    %1324 = vmin.xlane.f32.xlu0 %v1323
    %v1325 = vpop.xlane.xlu0 %1324
    %v1326 = vsel %vm534, %v1259, inf
    %v1327 = vmin.f32 %v1258, %v1326
    %1328 = vmin.xlane.f32.xlu0 %v1327
    %v1329 = vpop.xlane.xlu0 %1328
    %v1330 = vsel %vm534, %v1261, inf
    %v1331 = vmin.f32 %v1260, %v1330
    %1332 = vmin.xlane.f32.xlu0 %v1331
    %v1333 = vpop.xlane.xlu0 %1332
    %v1334 = vsel %vm534, %v1263, -inf
    %v1335 = vmax.f32 %v1262, %v1334
    %1336 = vmax.xlane.f32.xlu0 %v1335
    %v1337 = vpop.xlane.xlu0 %1336
    %v1338 = vsel %vm534, %v1265, -inf
    %v1339 = vmax.f32 %v1264, %v1338
    %1340 = vmax.xlane.f32.xlu0 %v1339
    %v1341 = vpop.xlane.xlu0 %1340
    %v1342 = vsel %vm534, %v1267, -inf
    %v1343 = vmax.f32 %v1266, %v1342
    %1344 = vmax.xlane.f32.xlu0 %v1343
    %v1345 = vpop.xlane.xlu0 %1344
    %v1346 = vsel %vm534, %v1269, -inf
    %v1347 = vmax.f32 %v1268, %v1346
    %1348 = vmax.xlane.f32.xlu0 %v1347
    %v1349 = vpop.xlane.xlu0 %1348
    %v1350 = vsel %vm534, %v1271, -inf
    %v1351 = vmax.f32 %v1270, %v1350
    %1352 = vmax.xlane.f32.xlu0 %v1351
    %v1353 = vpop.xlane.xlu0 %1352
    %v1354 = vsel %vm534, %v1273, -inf
    %v1355 = vmax.f32 %v1272, %v1354
    %1356 = vmax.xlane.f32.xlu0 %v1355
    %v1357 = vpop.xlane.xlu0 %1356
    %v1358 = vsel %vm534, %v1275, -inf
    %v1359 = vmax.f32 %v1274, %v1358
    %1360 = vmax.xlane.f32.xlu0 %v1359
    %v1361 = vpop.xlane.xlu0 %1360
    %v1362 = vsel %vm534, %v1277, -inf
    %v1363 = vmax.f32 %v1276, %v1362
    %1364 = vmax.xlane.f32.xlu0 %v1363
    %v1365 = vpop.xlane.xlu0 %1364
    %v1366 = vsel %vm534, %v1279, -inf
    %v1367 = vmax.f32 %v1278, %v1366
    %1368 = vmax.xlane.f32.xlu0 %v1367
    %v1369 = vpop.xlane.xlu0 %1368
    %v1370 = vsel %vm534, %v1281, -inf
    %v1371 = vmax.f32 %v1280, %v1370
    %1372 = vmax.xlane.f32.xlu0 %v1371
    %v1373 = vpop.xlane.xlu0 %1372
    %v1374 = vsel %vm534, %v1283, -inf
    %v1375 = vmax.f32 %v1282, %v1374
    %1376 = vmax.xlane.f32.xlu0 %v1375
    %v1377 = vpop.xlane.xlu0 %1376
    %v1378 = vsel %vm534, %v1285, -inf
    %v1379 = vmax.f32 %v1284, %v1378
    %1380 = vmax.xlane.f32.xlu0 %v1379
    %v1381 = vpop.xlane.xlu0 %1380
    %v1382 = vsub.f32 %v1337, %v1289
    %v1383 = vsub.f32 %v1341, %v1293
    %v1384 = vsub.f32 %v1345, %v1297
    %v1385 = vsub.f32 %v1349, %v1301
    %v1386 = vsub.f32 %v1353, %v1305
    %v1387 = vsub.f32 %v1357, %v1309
    %v1388 = vsub.f32 %v1361, %v1313
    %v1389 = vsub.f32 %v1365, %v1317
    %v1390 = vsub.f32 %v1369, %v1321
    %v1391 = vsub.f32 %v1373, %v1325
    %v1392 = vsub.f32 %v1377, %v1329
    %v1393 = vsub.f32 %v1381, %v1333
    %vm1394 = vcmp.eq.f32.partialorder %v1382, 0.0
    %vm1395 = vcmp.eq.f32.partialorder %v1383, 0.0
    %vm1396 = vcmp.eq.f32.partialorder %v1384, 0.0
    %vm1397 = vcmp.eq.f32.partialorder %v1385, 0.0
    %vm1398 = vcmp.eq.f32.partialorder %v1386, 0.0
    %vm1399 = vcmp.eq.f32.partialorder %v1387, 0.0
    %vm1400 = vcmp.eq.f32.partialorder %v1388, 0.0
    %vm1401 = vcmp.eq.f32.partialorder %v1389, 0.0
    %vm1402 = vcmp.eq.f32.partialorder %v1390, 0.0
    %vm1403 = vcmp.eq.f32.partialorder %v1391, 0.0
    %vm1404 = vcmp.eq.f32.partialorder %v1392, 0.0
    %vm1405 = vcmp.eq.f32.partialorder %v1393, 0.0
    %v1406 = vsel %vm1394, 1e-06, %v1382
    %v1407 = vsel %vm1395, 1e-06, %v1383
    %v1408 = vsel %vm1396, 1e-06, %v1384
    %v1409 = vsel %vm1397, 1e-06, %v1385
    %v1410 = vsel %vm1398, 1e-06, %v1386
    %v1411 = vsel %vm1399, 1e-06, %v1387
    %v1412 = vsel %vm1400, 1e-06, %v1388
    %v1413 = vsel %vm1401, 1e-06, %v1389
    %v1414 = vsel %vm1402, 1e-06, %v1390
    %v1415 = vsel %vm1403, 1e-06, %v1391
    %v1416 = vsel %vm1404, 1e-06, %v1392
    %v1417 = vsel %vm1405, 1e-06, %v1393
    %v1418 = vsub.f32 %v1180, %v1289
    %v1419 = vsub.f32 %v1182, %v1289
    %v1420 = vsub.f32 %v1184, %v1293
    %v1421 = vsub.f32 %v1186, %v1293
    %v1422 = vsub.f32 %v1190, %v1297
    %v1423 = vsub.f32 %v1192, %v1297
    %v1424 = vsub.f32 %v1194, %v1301
    %v1425 = vsub.f32 %v1196, %v1301
    %v1426 = vsub.f32 %v1200, %v1305
    %v1427 = vsub.f32 %v1202, %v1305
    %v1428 = vsub.f32 %v1204, %v1309
    %v1429 = vsub.f32 %v1206, %v1309
    %v1430 = vsub.f32 %v1210, %v1313
    %v1431 = vsub.f32 %v1212, %v1313
    %v1432 = vsub.f32 %v1214, %v1317
    %v1433 = vsub.f32 %v1216, %v1317
    %v1434 = vsub.f32 %v1220, %v1321
    %v1435 = vsub.f32 %v1222, %v1321
    %v1436 = vsub.f32 %v1224, %v1325
    %v1437 = vsub.f32 %v1226, %v1325
    %v1438 = vsub.f32 %v1230, %v1329
    %v1439 = vsub.f32 %v1232, %v1329
    %v1440 = vsub.f32 %v1234, %v1333
    %v1441 = vsub.f32 %v1236, %v1333
    %v1442 = vrcp.pop %v1406
    %v1443 = vmul.f32 %v1418, %v1442
    %v1444 = vmul.f32 %v1419, %v1442
    %v1445 = vrcp.pop %v1407
    %v1446 = vmul.f32 %v1420, %v1445
    %v1447 = vmul.f32 %v1421, %v1445
    %v1448 = vrcp.pop %v1408
    %v1449 = vmul.f32 %v1422, %v1448
    %v1450 = vmul.f32 %v1423, %v1448
    %v1451 = vrcp.pop %v1409
    %v1452 = vmul.f32 %v1424, %v1451
    %v1453 = vmul.f32 %v1425, %v1451
    %v1454 = vrcp.pop %v1410
    %v1455 = vmul.f32 %v1426, %v1454
    %v1456 = vmul.f32 %v1427, %v1454
    %v1457 = vrcp.pop %v1411
    %v1458 = vmul.f32 %v1428, %v1457
    %v1459 = vmul.f32 %v1429, %v1457
    %v1460 = vrcp.pop %v1412
    %v1461 = vmul.f32 %v1430, %v1460
    %v1462 = vmul.f32 %v1431, %v1460
    %v1463 = vrcp.pop %v1413
    %v1464 = vmul.f32 %v1432, %v1463
    %v1465 = vmul.f32 %v1433, %v1463
    %v1466 = vrcp.pop %v1414
    %v1467 = vmul.f32 %v1434, %v1466
    %v1468 = vmul.f32 %v1435, %v1466
    %v1469 = vrcp.pop %v1415
    %v1470 = vmul.f32 %v1436, %v1469
    %v1471 = vmul.f32 %v1437, %v1469
    %v1472 = vrcp.pop %v1416
    %v1473 = vmul.f32 %v1438, %v1472
    %v1474 = vmul.f32 %v1439, %v1472
    %v1475 = vrcp.pop %v1417
    %v1476 = vmul.f32 %v1440, %v1475
    %v1477 = vmul.f32 %v1441, %v1475
    %v1478 = vsel %vm462, %v1443, -9e+15
    %v1479 = vsel %vm463, %v1444, -9e+15
    %v1480 = vsel %vm464, %v1446, -9e+15
    %v1481 = vsel %vm465, %v1447, -9e+15
    %v1482 = vsel %vm466, %v1449, -9e+15
    %v1483 = vsel %vm467, %v1450, -9e+15
    %v1484 = vsel %vm468, %v1452, -9e+15
    %v1485 = vsel %vm469, %v1453, -9e+15
    %v1486 = vsel %vm470, %v1455, -9e+15
    %v1487 = vsel %vm471, %v1456, -9e+15
    %v1488 = vsel %vm472, %v1458, -9e+15
    %v1489 = vsel %vm473, %v1459, -9e+15
    %v1490 = vsel %vm474, %v1461, -9e+15
    %v1491 = vsel %vm475, %v1462, -9e+15
    %v1492 = vsel %vm476, %v1464, -9e+15
    %v1493 = vsel %vm477, %v1465, -9e+15
    %v1494 = vsel %vm478, %v1467, -9e+15
    %v1495 = vsel %vm479, %v1468, -9e+15
    %v1496 = vsel %vm480, %v1470, -9e+15
    %v1497 = vsel %vm481, %v1471, -9e+15
    %v1498 = vsel %vm482, %v1473, -9e+15
    %v1499 = vsel %vm483, %v1474, -9e+15
    %v1500 = vsel %vm484, %v1476, -9e+15
    %v1501 = vsel %vm485, %v1477, -9e+15
    %v1502 = vsel %vm534, %v1479, -inf
    %v1503 = vmax.f32 %v1478, %v1502
    %1504 = vmax.xlane.f32.xlu0 %v1503
    %v1505 = vpop.xlane.xlu0 %1504
    %v1506 = vsel %vm534, %v1481, -inf
    %v1507 = vmax.f32 %v1480, %v1506
    %1508 = vmax.xlane.f32.xlu0 %v1507
    %v1509 = vpop.xlane.xlu0 %1508
    %v1510 = vsel %vm534, %v1483, -inf
    %v1511 = vmax.f32 %v1482, %v1510
    %1512 = vmax.xlane.f32.xlu0 %v1511
    %v1513 = vpop.xlane.xlu0 %1512
    %v1514 = vsel %vm534, %v1485, -inf
    %v1515 = vmax.f32 %v1484, %v1514
    %1516 = vmax.xlane.f32.xlu0 %v1515
    %v1517 = vpop.xlane.xlu0 %1516
    %v1518 = vsel %vm534, %v1487, -inf
    %v1519 = vmax.f32 %v1486, %v1518
    %1520 = vmax.xlane.f32.xlu0 %v1519
    %v1521 = vpop.xlane.xlu0 %1520
    %v1522 = vsel %vm534, %v1489, -inf
    %v1523 = vmax.f32 %v1488, %v1522
    %1524 = vmax.xlane.f32.xlu0 %v1523
    %v1525 = vpop.xlane.xlu0 %1524
    %v1526 = vsel %vm534, %v1491, -inf
    %v1527 = vmax.f32 %v1490, %v1526
    %1528 = vmax.xlane.f32.xlu0 %v1527
    %v1529 = vpop.xlane.xlu0 %1528
    %v1530 = vsel %vm534, %v1493, -inf
    %v1531 = vmax.f32 %v1492, %v1530
    %1532 = vmax.xlane.f32.xlu0 %v1531
    %v1533 = vpop.xlane.xlu0 %1532
    %v1534 = vsel %vm534, %v1495, -inf
    %v1535 = vmax.f32 %v1494, %v1534
    %1536 = vmax.xlane.f32.xlu0 %v1535
    %v1537 = vpop.xlane.xlu0 %1536
    %v1538 = vsel %vm534, %v1497, -inf
    %v1539 = vmax.f32 %v1496, %v1538
    %1540 = vmax.xlane.f32.xlu0 %v1539
    %v1541 = vpop.xlane.xlu0 %1540
    %v1542 = vsel %vm534, %v1499, -inf
    %v1543 = vmax.f32 %v1498, %v1542
    %1544 = vmax.xlane.f32.xlu0 %v1543
    %v1545 = vpop.xlane.xlu0 %1544
    %v1546 = vsel %vm534, %v1501, -inf
    %v1547 = vmax.f32 %v1500, %v1546
    %1548 = vmax.xlane.f32.xlu0 %v1547
    %v1549 = vpop.xlane.xlu0 %1548
    %v1550 = vsub.f32 %v1478, %v1505
    %v1551 = vsub.f32 %v1479, %v1505
    %v1552 = vsub.f32 %v1480, %v1509
    %v1553 = vsub.f32 %v1481, %v1509
    %v1554 = vsub.f32 %v1482, %v1513
    %v1555 = vsub.f32 %v1483, %v1513
    %v1556 = vsub.f32 %v1484, %v1517
    %v1557 = vsub.f32 %v1485, %v1517
    %v1558 = vsub.f32 %v1486, %v1521
    %v1559 = vsub.f32 %v1487, %v1521
    %v1560 = vsub.f32 %v1488, %v1525
    %v1561 = vsub.f32 %v1489, %v1525
    %v1562 = vsub.f32 %v1490, %v1529
    %v1563 = vsub.f32 %v1491, %v1529
    %v1564 = vsub.f32 %v1492, %v1533
    %v1565 = vsub.f32 %v1493, %v1533
    %v1566 = vsub.f32 %v1494, %v1537
    %v1567 = vsub.f32 %v1495, %v1537
    %v1568 = vsub.f32 %v1496, %v1541
    %v1569 = vsub.f32 %v1497, %v1541
    %v1570 = vsub.f32 %v1498, %v1545
    %v1571 = vsub.f32 %v1499, %v1545
    %v1572 = vsub.f32 %v1500, %v1549
    %v1573 = vsub.f32 %v1501, %v1549
    %v1574 = vmul.f32 %v1550, 1.442695
    %v1575 = vpow.pop %v1574
    %v1576 = vmul.f32 %v1551, 1.442695
    %v1577 = vpow.pop %v1576
    %v1578 = vmul.f32 %v1552, 1.442695
    %v1579 = vpow.pop %v1578
    %v1580 = vmul.f32 %v1553, 1.442695
    %v1581 = vpow.pop %v1580
    %v1582 = vmul.f32 %v1554, 1.442695
    %v1583 = vpow.pop %v1582
    %v1584 = vmul.f32 %v1555, 1.442695
    %v1585 = vpow.pop %v1584
    %v1586 = vmul.f32 %v1556, 1.442695
    %v1587 = vpow.pop %v1586
    %v1588 = vmul.f32 %v1557, 1.442695
    %v1589 = vpow.pop %v1588
    %v1590 = vmul.f32 %v1558, 1.442695
    %v1591 = vpow.pop %v1590
    %v1592 = vmul.f32 %v1559, 1.442695
    %v1593 = vpow.pop %v1592
    %v1594 = vmul.f32 %v1560, 1.442695
    %v1595 = vpow.pop %v1594
    %v1596 = vmul.f32 %v1561, 1.442695
    %v1597 = vpow.pop %v1596
    %v1598 = vmul.f32 %v1562, 1.442695
    %v1599 = vpow.pop %v1598
    %v1600 = vmul.f32 %v1563, 1.442695
    %v1601 = vpow.pop %v1600
    %v1602 = vmul.f32 %v1564, 1.442695
    %v1603 = vpow.pop %v1602
    %v1604 = vmul.f32 %v1565, 1.442695
    %v1605 = vpow.pop %v1604
    %v1606 = vmul.f32 %v1566, 1.442695
    %v1607 = vpow.pop %v1606
    %v1608 = vmul.f32 %v1567, 1.442695
    %v1609 = vpow.pop %v1608
    %v1610 = vmul.f32 %v1568, 1.442695
    %v1611 = vpow.pop %v1610
    %v1612 = vmul.f32 %v1569, 1.442695
    %v1613 = vpow.pop %v1612
    %v1614 = vmul.f32 %v1570, 1.442695
    %v1615 = vpow.pop %v1614
    %v1616 = vmul.f32 %v1571, 1.442695
    %v1617 = vpow.pop %v1616
    %v1618 = vmul.f32 %v1572, 1.442695
    %v1619 = vpow.pop %v1618
    %v1620 = vmul.f32 %v1573, 1.442695
    %v1621 = vpow.pop %v1620
    %v1622 = vsel %vm919, %v1575, 0.0
    %v1623 = vsel %vm920, %v1577, 0.0
    %v1624 = vsel %vm921, %v1579, 0.0
    %v1625 = vsel %vm922, %v1581, 0.0
    %v1626 = vsel %vm923, %v1583, 0.0
    %v1627 = vsel %vm924, %v1585, 0.0
    %v1628 = vsel %vm925, %v1587, 0.0
    %v1629 = vsel %vm926, %v1589, 0.0
    %v1630 = vsel %vm927, %v1591, 0.0
    %v1631 = vsel %vm928, %v1593, 0.0
    %v1632 = vsel %vm929, %v1595, 0.0
    %v1633 = vsel %vm930, %v1597, 0.0
    %v1634 = vsel %vm931, %v1599, 0.0
    %v1635 = vsel %vm932, %v1601, 0.0
    %v1636 = vsel %vm933, %v1603, 0.0
    %v1637 = vsel %vm934, %v1605, 0.0
    %v1638 = vsel %vm935, %v1607, 0.0
    %v1639 = vsel %vm936, %v1609, 0.0
    %v1640 = vsel %vm937, %v1611, 0.0
    %v1641 = vsel %vm938, %v1613, 0.0
    %v1642 = vsel %vm939, %v1615, 0.0
    %v1643 = vsel %vm940, %v1617, 0.0
    %v1644 = vsel %vm941, %v1619, 0.0
    %v1645 = vsel %vm942, %v1621, 0.0
    %v1646 = vsel %vm534, %v1623, 0.0
    %v1647 = vadd.f32 %v1622, %v1646
    %1648 = vadd.xlane.f32.xlu0 %v1647
    %v1649 = vpop.xlane.xlu0 %1648
    %v1650 = vsel %vm534, %v1625, 0.0
    %v1651 = vadd.f32 %v1624, %v1650
    %1652 = vadd.xlane.f32.xlu0 %v1651
    %v1653 = vpop.xlane.xlu0 %1652
    %v1654 = vsel %vm534, %v1627, 0.0
    %v1655 = vadd.f32 %v1626, %v1654
    %1656 = vadd.xlane.f32.xlu0 %v1655
    %v1657 = vpop.xlane.xlu0 %1656
    %v1658 = vsel %vm534, %v1629, 0.0
    %v1659 = vadd.f32 %v1628, %v1658
    %1660 = vadd.xlane.f32.xlu0 %v1659
    %v1661 = vpop.xlane.xlu0 %1660
    %v1662 = vsel %vm534, %v1631, 0.0
    %v1663 = vadd.f32 %v1630, %v1662
    %1664 = vadd.xlane.f32.xlu0 %v1663
    %v1665 = vpop.xlane.xlu0 %1664
    %v1666 = vsel %vm534, %v1633, 0.0
    %v1667 = vadd.f32 %v1632, %v1666
    %1668 = vadd.xlane.f32.xlu0 %v1667
    %v1669 = vpop.xlane.xlu0 %1668
    %v1670 = vsel %vm534, %v1635, 0.0
    %v1671 = vadd.f32 %v1634, %v1670
    %1672 = vadd.xlane.f32.xlu0 %v1671
    %v1673 = vpop.xlane.xlu0 %1672
    %v1674 = vsel %vm534, %v1637, 0.0
    %v1675 = vadd.f32 %v1636, %v1674
    %1676 = vadd.xlane.f32.xlu0 %v1675
    %v1677 = vpop.xlane.xlu0 %1676
    %v1678 = vsel %vm534, %v1639, 0.0
    %v1679 = vadd.f32 %v1638, %v1678
    %1680 = vadd.xlane.f32.xlu0 %v1679
    %v1681 = vpop.xlane.xlu0 %1680
    %v1682 = vsel %vm534, %v1641, 0.0
    %v1683 = vadd.f32 %v1640, %v1682
    %1684 = vadd.xlane.f32.xlu0 %v1683
    %v1685 = vpop.xlane.xlu0 %1684
    %v1686 = vsel %vm534, %v1643, 0.0
    %v1687 = vadd.f32 %v1642, %v1686
    %1688 = vadd.xlane.f32.xlu0 %v1687
    %v1689 = vpop.xlane.xlu0 %1688
    %v1690 = vsel %vm534, %v1645, 0.0
    %v1691 = vadd.f32 %v1644, %v1690
    %1692 = vadd.xlane.f32.xlu0 %v1691
    %v1693 = vpop.xlane.xlu0 %1692
    %v1694 = vrcp.pop %v1649
    %v1695 = vrcp.pop %v1653
    %v1696 = vrcp.pop %v1657
    %v1697 = vrcp.pop %v1661
    %v1698 = vrcp.pop %v1665
    %v1699 = vrcp.pop %v1669
    %v1700 = vrcp.pop %v1673
    %v1701 = vrcp.pop %v1677
    %v1702 = vrcp.pop %v1681
    %v1703 = vrcp.pop %v1685
    %v1704 = vrcp.pop %v1689
    %v1705 = vrcp.pop %v1693
    %v1706 = vmul.f32 %v1622, %v1694
    %v1707 = vmul.f32 %v1623, %v1694
    %v1708 = vmul.f32 %v1624, %v1695
    %v1709 = vmul.f32 %v1625, %v1695
    %v1710 = vmul.f32 %v1626, %v1696
    %v1711 = vmul.f32 %v1627, %v1696
    %v1712 = vmul.f32 %v1628, %v1697
    %v1713 = vmul.f32 %v1629, %v1697
    %v1714 = vmul.f32 %v1630, %v1698
    %v1715 = vmul.f32 %v1631, %v1698
    %v1716 = vmul.f32 %v1632, %v1699
    %v1717 = vmul.f32 %v1633, %v1699
    %v1718 = vmul.f32 %v1634, %v1700
    %v1719 = vmul.f32 %v1635, %v1700
    %v1720 = vmul.f32 %v1636, %v1701
    %v1721 = vmul.f32 %v1637, %v1701
    %v1722 = vmul.f32 %v1638, %v1702
    %v1723 = vmul.f32 %v1639, %v1702
    %v1724 = vmul.f32 %v1640, %v1703
    %v1725 = vmul.f32 %v1641, %v1703
    %v1726 = vmul.f32 %v1642, %v1704
    %v1727 = vmul.f32 %v1643, %v1704
    %v1728 = vmul.f32 %v1644, %v1705
    %v1729 = vmul.f32 %v1645, %v1705
    %v1730 = vpack.c.bf16 %v152, %v152
    %v1731 = vpack.c.bf16 %v1708, %v1706
    %v1732 = vpack.c.bf16 %v1709, %v1707
    %v1733 = vpack.c.bf16 %v1712, %v1710
    %v1734 = vpack.c.bf16 %v1713, %v1711
    %v1735 = vpack.c.bf16 %v1716, %v1714
    %v1736 = vpack.c.bf16 %v1717, %v1715
    %v1737 = vpack.c.bf16 %v1720, %v1718
    %v1738 = vpack.c.bf16 %v1721, %v1719
    %v1739 = vpack.c.bf16 %v1724, %v1722
    %v1740 = vpack.c.bf16 %v1725, %v1723
    %v1741 = vpack.c.bf16 %v1728, %v1726
    %v1742 = vpack.c.bf16 %v1729, %v1727
    %v1744 = vsel %vm1064, %v1730, 0
    %1746 = vmatprep.subr.bf16.mxu0 %v1732
    %1747 = vmatpush1.bf16.msra.mxu0 %v1731
    %1748 = vmatprep.subr.bf16.mxu0 %v1734
    %1749 = vmatpush1.bf16.msra.mxu0 %v1733
    %1750 = vmatprep.subr.bf16.mxu0 %v1736
    %1751 = vmatpush1.bf16.msra.mxu0 %v1735
    %1752 = vmatprep.subr.bf16.mxu0 %v1738
    %1753 = vmatpush1.bf16.msra.mxu0 %v1737
    %1754 = vmatprep.subr.bf16.mxu0 %v1740
    %1755 = vmatpush1.bf16.msra.mxu0 %v1739
    %1756 = vmatprep.subr.bf16.mxu0 %v1742
    %1757 = vmatpush1.bf16.msra.mxu0 %v1741
    %1758 = vmatprep.subr.bf16.mxu0 0
    %1759 = vmatpush1.bf16.msra.mxu0 0
    %1760 = vmatprep.subr.bf16.mxu0 0
    %1761 = vmatpush1.bf16.msra.mxu0 0
    %1762 = vmatprep.subr.bf16.mxu0 0
    %1763 = vmatpush1.bf16.msra.mxu0 0
    %1764 = vmatprep.subr.bf16.mxu0 0
    %1765 = vmatpush1.bf16.msra.mxu0 0
    %1766 = vmatprep.subr.bf16.mxu0 0
    %1767 = vmatpush1.bf16.msra.mxu0 0
    %1768 = vmatprep.subr.bf16.mxu0 0
    %1769 = vmatpush1.bf16.msra.mxu0 0
    %1770 = vmatprep.subr.bf16.mxu0 0
    %1771 = vmatpush1.bf16.msra.mxu0 0
    %1772 = vmatprep.subr.bf16.mxu0 0
    %1773 = vmatpush1.bf16.msra.mxu0 0
    %1774 = vmatprep.subr.bf16.mxu0 0
    %1775 = vmatpush1.bf16.msra.mxu0 0
    %1776 = vmatprep.subr.bf16.mxu0 0
    %1777 = vmatpush1.bf16.msra.mxu0 0
    %1778 = vmatprep.mubr.bf16.mxu0 0
    %1779 = vmatmul.mubr.bf16.gmra.mrb[0].mxu0 %v1744
    %v1780 = vpop.f32.mrb[0].mxu0
    %v1781 = vadd.f32 0.0, %v1780
    %v1782 = vpop.f32.mrb[0].mxu0
    %v1783 = vadd.f32 0.0, %v1782
    %v1784 = vpop.f32.mrb[0].mxu0
    %v1785 = vpop.f32.mrb[0].mxu0
    %1786 = vdwg.mxu0
    %v1787 = vpack.c.bf16 %v1781, %v1103
    %v1788 = vpack.c.bf16 %v1783, %v1105
    %v1789 = vpack.c.bf16 %v33, %v32
    %v1794 = vunpack.c.l.b16 %v92
    %v1795 = vunpack.c.l.b16 %v93
    %v1796 = vunpack.c.l.b16 %v94
    %v1797 = vunpack.c.l.b16 %v95
    %v1798 = vpack.c.b16 %v1795, %v1794
    %v1799 = vpack.c.b16 %v1797, %v1796
    %v1803 = vsel %vm110, %v1789, 0
    %1805 = vmatprep.subr.bf16.mxu0 0
    %1806 = vmatpush1.bf16.msra.mxu0 %v1798
    %1807 = vmatprep.subr.bf16.mxu0 0
    %1808 = vmatpush1.bf16.msra.mxu0 %v1799
    %1809 = vmatprep.subr.bf16.mxu0 0
    %1810 = vmatpush1.bf16.msra.mxu0 0
    %1811 = vmatprep.subr.bf16.mxu0 0
    %1812 = vmatpush1.bf16.msra.mxu0 0
    %1813 = vmatprep.subr.bf16.mxu0 0
    %1814 = vmatpush1.bf16.msra.mxu0 0
    %1815 = vmatprep.subr.bf16.mxu0 0
    %1816 = vmatpush1.bf16.msra.mxu0 0
    %1817 = vmatprep.subr.bf16.mxu0 0
    %1818 = vmatpush1.bf16.msra.mxu0 0
    %1819 = vmatprep.subr.bf16.mxu0 0
    %1820 = vmatpush1.bf16.msra.mxu0 0
    %1821 = vmatprep.subr.bf16.mxu0 0
    %1822 = vmatpush1.bf16.msra.mxu0 0
    %1823 = vmatprep.subr.bf16.mxu0 0
    %1824 = vmatpush1.bf16.msra.mxu0 0
    %1825 = vmatprep.subr.bf16.mxu0 0
    %1826 = vmatpush1.bf16.msra.mxu0 0
    %1827 = vmatprep.subr.bf16.mxu0 0
    %1828 = vmatpush1.bf16.msra.mxu0 0
    %1829 = vmatprep.subr.bf16.mxu0 0
    %1830 = vmatpush1.bf16.msra.mxu0 0
    %1831 = vmatprep.subr.bf16.mxu0 0
    %1832 = vmatpush1.bf16.msra.mxu0 0
    %1833 = vmatprep.subr.bf16.mxu0 0
    %1834 = vmatpush1.bf16.msra.mxu0 0
    %1835 = vmatprep.subr.bf16.mxu0 0
    %1836 = vmatpush1.bf16.msra.mxu0 0
    %1837 = vmatprep.mubr.bf16.mxu0 0
    %1838 = vmatmul.mubr.bf16.gmra.mrb[0].mxu0 %v1803
    %v1839 = vpop.f32.mrb[0].mxu0
    %v1840 = vadd.f32 0.0, %v1839
    %v1841 = vpop.f32.mrb[0].mxu0
    %v1842 = vpop.f32.mrb[0].mxu0
    %v1843 = vadd.f32 0.0, %v1842
    %v1844 = vpop.f32.mrb[0].mxu0
    %1845 = vdwg.mxu0
    %v1870 = vunpack.c.l.b16 %v68
    %v1871 = vunpack.c.l.b16 %v69
    %v1872 = vunpack.c.l.b16 %v70
    %v1873 = vunpack.c.l.b16 %v71
    %v1874 = vunpack.c.l.b16 %v72
    %v1875 = vunpack.c.l.b16 %v73
    %v1876 = vunpack.c.l.b16 %v74
    %v1877 = vunpack.c.l.b16 %v75
    %v1878 = vunpack.c.l.b16 %v76
    %v1879 = vunpack.c.l.b16 %v77
    %v1880 = vunpack.c.l.b16 %v78
    %v1881 = vunpack.c.l.b16 %v79
    %v1882 = vunpack.c.l.b16 %v80
    %v1883 = vunpack.c.l.b16 %v81
    %v1884 = vunpack.c.l.b16 %v82
    %v1885 = vunpack.c.l.b16 %v83
    %v1886 = vunpack.c.l.b16 %v84
    %v1887 = vunpack.c.l.b16 %v85
    %v1888 = vunpack.c.l.b16 %v86
    %v1889 = vunpack.c.l.b16 %v87
    %v1890 = vunpack.c.l.b16 %v88
    %v1891 = vunpack.c.l.b16 %v89
    %v1892 = vunpack.c.l.b16 %v90
    %v1893 = vunpack.c.l.b16 %v91
    %v1894 = vpack.c.b16 %v1871, %v1870
    %v1895 = vpack.c.b16 %v1873, %v1872
    %v1896 = vpack.c.b16 %v1875, %v1874
    %v1897 = vpack.c.b16 %v1877, %v1876
    %v1898 = vpack.c.b16 %v1879, %v1878
    %v1899 = vpack.c.b16 %v1881, %v1880
    %v1900 = vpack.c.b16 %v1883, %v1882
    %v1901 = vpack.c.b16 %v1885, %v1884
    %v1902 = vpack.c.b16 %v1887, %v1886
    %v1903 = vpack.c.b16 %v1889, %v1888
    %v1904 = vpack.c.b16 %v1891, %v1890
    %v1905 = vpack.c.b16 %v1893, %v1892
    %v1919 = vsel %vm534, %v1788, 0
    %1921 = vmatprep.subr.bf16.mxu0 0
    %1922 = vmatpush1.bf16.msra.mxu0 %v1894
    %1923 = vmatprep.subr.bf16.mxu0 0
    %1924 = vmatpush1.bf16.msra.mxu0 %v1895
    %1925 = vmatprep.subr.bf16.mxu0 0
    %1926 = vmatpush1.bf16.msra.mxu0 %v1896
    %1927 = vmatprep.subr.bf16.mxu0 0
    %1928 = vmatpush1.bf16.msra.mxu0 %v1897
    %1929 = vmatprep.subr.bf16.mxu0 0
    %1930 = vmatpush1.bf16.msra.mxu0 %v1898
    %1931 = vmatprep.subr.bf16.mxu0 0
    %1932 = vmatpush1.bf16.msra.mxu0 %v1899
    %1933 = vmatprep.subr.bf16.mxu0 0
    %1934 = vmatpush1.bf16.msra.mxu0 %v1900
    %1935 = vmatprep.subr.bf16.mxu0 0
    %1936 = vmatpush1.bf16.msra.mxu0 %v1901
    %1937 = vmatprep.subr.bf16.mxu0 0
    %1938 = vmatpush1.bf16.msra.mxu0 %v1902
    %1939 = vmatprep.subr.bf16.mxu0 0
    %1940 = vmatpush1.bf16.msra.mxu0 %v1903
    %1941 = vmatprep.subr.bf16.mxu0 0
    %1942 = vmatpush1.bf16.msra.mxu0 %v1904
    %1943 = vmatprep.subr.bf16.mxu0 0
    %1944 = vmatpush1.bf16.msra.mxu0 %v1905
    %1945 = vmatprep.subr.bf16.mxu0 0
    %1946 = vmatpush1.bf16.msra.mxu0 0
    %1947 = vmatprep.subr.bf16.mxu0 0
    %1948 = vmatpush1.bf16.msra.mxu0 0
    %1949 = vmatprep.subr.bf16.mxu0 0
    %1950 = vmatpush1.bf16.msra.mxu0 0
    %1951 = vmatprep.subr.bf16.mxu0 0
    %1952 = vmatpush1.bf16.msra.mxu0 0
    %1953 = vmatprep.mubr.bf16.mxu0 %v1919
    %1954 = vmatmul.mubr.bf16.gmra.mrb[0].mxu0 %v1787
    %v1955 = vpop.f32.mrb[0].mxu0
    %v1956 = vadd.f32 %v1840, %v1955
    %v1957 = vpop.f32.mrb[0].mxu0
    %v1958 = vpop.f32.mrb[0].mxu0
    %v1959 = vadd.f32 %v1843, %v1958
    %v1960 = vpop.f32.mrb[0].mxu0
    %1961 = vdwg.mxu0
    %v1963 = vlaneseq
    %v1964 = vshrl.u32 %v1963, 7
    %v1965 = vsub.s32 0, %v1964
    %v1966 = vrot.slane %v96, %v1965
    %v1968 = vadd.f32 %v1956, %v1966
    %v1969 = vadd.f32 %v1959, %v1966
    %v1970 = vxor.u32 %v1968, 2147483648
    %v1971 = vxor.u32 %v1969, 2147483648
    %v1972 = vmul.f32 %v1970, 1.442695
    %v1973 = vpow.pop %v1972
    %v1974 = vmul.f32 %v1971, 1.442695
    %v1975 = vpow.pop %v1974
    %v1976 = vadd.f32 %v1973, 1.0
    %v1977 = vadd.f32 %v1975, 1.0
    %v1978 = vrcp.pop %v1976
    %v1979 = vmul.f32 1.0, %v1978
    %v1980 = vrcp.pop %v1977
    %v1981 = vmul.f32 1.0, %v1980
    %v1982 = vmul.f32 %v32, %v1979
    %v1983 = vmul.f32 %v33, %v1981
    %v1984 = vpack.c.bf16 %v1983, %v1982
    %v1989 = vunpack.c.l.b16 %v46
    %v1990 = vunpack.c.l.b16 %v47
    %v1991 = vunpack.c.l.b16 %v48
    %v1992 = vunpack.c.l.b16 %v49
    %v1993 = vpack.c.b16 %v1990, %v1989
    %v1994 = vpack.c.b16 %v1992, %v1991
    %v1998 = vsel %vm110, %v1984, 0
    %2000 = vmatprep.subr.bf16.mxu0 0
    %2001 = vmatpush1.bf16.msra.mxu0 %v1993
    %2002 = vmatprep.subr.bf16.mxu0 0
    %2003 = vmatpush1.bf16.msra.mxu0 %v1994
    %2004 = vmatprep.subr.bf16.mxu0 0
    %2005 = vmatpush1.bf16.msra.mxu0 0
    %2006 = vmatprep.subr.bf16.mxu0 0
    %2007 = vmatpush1.bf16.msra.mxu0 0
    %2008 = vmatprep.subr.bf16.mxu0 0
    %2009 = vmatpush1.bf16.msra.mxu0 0
    %2010 = vmatprep.subr.bf16.mxu0 0
    %2011 = vmatpush1.bf16.msra.mxu0 0
    %2012 = vmatprep.subr.bf16.mxu0 0
    %2013 = vmatpush1.bf16.msra.mxu0 0
    %2014 = vmatprep.subr.bf16.mxu0 0
    %2015 = vmatpush1.bf16.msra.mxu0 0
    %2016 = vmatprep.subr.bf16.mxu0 0
    %2017 = vmatpush1.bf16.msra.mxu0 0
    %2018 = vmatprep.subr.bf16.mxu0 0
    %2019 = vmatpush1.bf16.msra.mxu0 0
    %2020 = vmatprep.subr.bf16.mxu0 0
    %2021 = vmatpush1.bf16.msra.mxu0 0
    %2022 = vmatprep.subr.bf16.mxu0 0
    %2023 = vmatpush1.bf16.msra.mxu0 0
    %2024 = vmatprep.subr.bf16.mxu0 0
    %2025 = vmatpush1.bf16.msra.mxu0 0
    %2026 = vmatprep.subr.bf16.mxu0 0
    %2027 = vmatpush1.bf16.msra.mxu0 0
    %2028 = vmatprep.subr.bf16.mxu0 0
    %2029 = vmatpush1.bf16.msra.mxu0 0
    %2030 = vmatprep.subr.bf16.mxu0 0
    %2031 = vmatpush1.bf16.msra.mxu0 0
    %2032 = vmatprep.mubr.bf16.mxu0 0
    %2033 = vmatmul.mubr.bf16.gmra.mrb[0].mxu0 %v1998
    %v2034 = vpop.f32.mrb[0].mxu0
    %v2035 = vadd.f32 0.0, %v2034
    %v2036 = vpop.f32.mrb[0].mxu0
    %v2037 = vpop.f32.mrb[0].mxu0
    %v2038 = vadd.f32 0.0, %v2037
    %v2039 = vpop.f32.mrb[0].mxu0
    %2040 = vdwg.mxu0
    %2043 = vrot.lane.b32.xlu0 %v2035, 64
    %v2044 = vpop.permute.xlu0 %2043
    %2045 = vrot.lane.b32.xlu0 %v2038, 64
    %v2046 = vpop.permute.xlu0 %2045
    %v2049 = vadd.f32 %v1968, %v2044
    %v2050 = vadd.f32 %v1969, %v2046
    %v2051 = vtanh.pop %v2049
    %v2052 = vtanh.pop %v2050
    %2055 = vrot.lane.b32.xlu0 %v32, 32
    %v2056 = vpop.permute.xlu0 %2055
    %2057 = vrot.lane.b32.xlu0 %v33, 32
    %v2058 = vpop.permute.xlu0 %2057
    %v2061 = vmul.f32 %v1979, %v2056
    %v2062 = vmul.f32 %v1981, %v2058
    %v2063 = vsub.f32 1.0, %v1979
    %v2064 = vsub.f32 1.0, %v1981
    %2067 = vrot.lane.b32.xlu0 %v2051, 96
    %v2068 = vpop.permute.xlu0 %2067
    %2069 = vrot.lane.b32.xlu0 %v2052, 96
    %v2070 = vpop.permute.xlu0 %2069
    %v2073 = vmul.f32 %v2063, %v2068
    %v2074 = vmul.f32 %v2064, %v2070
    %v2075 = vadd.f32 %v2061, %v2073
    %v2076 = vadd.f32 %v2062, %v2074
    %2079 = vrot.lane.b32.xlu0 %v2075, 96
    %v2080 = vpop.permute.xlu0 %2079
    %2081 = vrot.lane.b32.xlu0 %v2076, 96
    %v2082 = vpop.permute.xlu0 %2081
    %2085 = vst.msk [vmem:[#allocation2] sm:$0xff] %vm110, %v2080
    %2086 = vst.msk [vmem:[#allocation2 + $0x8] sm:$0xff] %vm110, %v2082
    // Predicated region
    $region22: #{gru_cell_forward.1} parent=1 // pred_check
      _
    $region23: #{gru_cell_forward.1} parent=1 // pred_check_branch
      %2088 = sbr.rel (0) target = $region25
    $region24: #{gru_cell_forward.1} parent=1 // pred_region
      %s2090 = ssub.s32 256, 256
      %2091 = vsyncadd [#allocation3], %s2090
      %s2092 = sshll.u32 [#allocation2], 4
      %s2093 = int_to_ptr.vmem [resolvable:$true] %s2092
      %2098 = dma.vmem_to_hbm [thread:$0]  %s2093, 256, %s5, [#allocation3], 128, 128, 8
    $region25: #{gru_cell_forward.1} parent=1 // pred_fallthru
      _
    // Predicated region
    $region26: #{gru_cell_forward.1} parent=1 // pred_check
      _
    $region27: #{gru_cell_forward.1} parent=1 // pred_check_branch
      %2100 = sbr.rel (0) target = $region29
    $region28: #{gru_cell_forward.1} parent=1 // pred_region
      %2101 = dma.done [#allocation3], 256
    $region29: #{gru_cell_forward.1} parent=1 // pred_fallthru
      _
    %2102 = vsyncpa [#allocation3], 1

</llo_original>
